<compile_context>
chip_gen: v5e
topology: v5e:2x2
jax: 0.10.0
libtpu: 0.0.40
codegen_flags: <defaults>
</compile_context>

<pallas_src>
import functools

import jax
import jax.numpy as jnp
from jax import lax
from jax.experimental import pallas as pl
from jax.experimental.pallas import tpu as pltpu


def _round_up(x, m):
    return (x + m - 1) // m * m


# ---------------------------------------------------------------------------
# Fused kernel: gather + logits + online LSE + in-place log-softmax finalize.
# ---------------------------------------------------------------------------
def _skipgram_kernel(idx_ref, emb_ref, w2_ref, out_ref,
                     gather_ref, hidden_ref, m_ref, l_ref, sem,
                     *, tb, tv, valid_v):
    b = pl.program_id(0)
    v = pl.program_id(1)
    last_v = pl.num_programs(1) - 1

    # ---- per-batch-tile init + embedding-row gather (once, at v == 0) -----
    @pl.when(v == 0)
    def _():
        m_ref[...] = jnp.full(m_ref.shape, -jnp.inf, m_ref.dtype)
        l_ref[...] = jnp.zeros(l_ref.shape, l_ref.dtype)

        row0 = b * tb

        @pl.loop(0, tb)
        def _(i):
            pltpu.make_async_copy(
                emb_ref.at[pl.ds(idx_ref[row0 + i], 1)],
                gather_ref.at[pl.ds(i, 1)],
                sem,
            ).start()

        @pl.loop(0, tb)
        def _(i):
            pltpu.make_async_copy(
                emb_ref.at[pl.ds(idx_ref[row0 + i], 1)],
                gather_ref.at[pl.ds(i, 1)],
                sem,
            ).wait()

        # Cast once into the bf16 hidden scratch (no per-step cast).
        hidden_ref[...] = gather_ref[...].astype(hidden_ref.dtype)

    # ---- bf16 MXU matmul, f32 accumulation ---------------------------------
    logits = jnp.dot(hidden_ref[...], w2_ref[...],
                     preferred_element_type=jnp.float32)          # [tb, tv]

    # Stream the raw logits into the vocab-resident output block.
    col0 = pl.multiple_of(v * tv, tv)
    out_ref[:, pl.ds(col0, tv)] = logits

    # ---- online log-sum-exp over the vocab axis ----------------------------
    def update(stat_logits):
        m_prev = m_ref[...]
        m_new = jnp.maximum(m_prev, jnp.max(stat_logits, axis=-1, keepdims=True))
        l_ref[...] = (jnp.exp(m_prev - m_new) * l_ref[...]
                      + jnp.sum(jnp.exp(stat_logits - m_new), axis=-1,
                                keepdims=True))
        m_ref[...] = m_new

    if valid_v % tv != 0:
        # Only the last vocab tile can contain padded columns; keep the fast
        # (unmasked) path for every other tile.
        is_last = v == last_v

        @pl.when(jnp.logical_not(is_last))
        def _():
            update(logits)

        @pl.when(is_last)
        def _():
            col = col0 + lax.broadcasted_iota(jnp.int32, logits.shape, 1)
            update(jnp.where(col < valid_v, logits, -jnp.inf))
    else:
        update(logits)

    # ---- finalize: log_softmax in place over the resident (tb, V_pad) block
    @pl.when(v == last_v)
    def _():
        out_ref[...] = out_ref[...] - (m_ref[...] + jnp.log(l_ref[...]))


# ---------------------------------------------------------------------------
# Wrappers.
# ---------------------------------------------------------------------------
def skipgram_forward_ids(idx, w_emb_t, w_out_t, *, tb=None, tv=None):
    """log_softmax(w_emb_t[idx] @ w_out_t, axis=1).

    idx:     [B] int token ids (avoids the dense one-hot HBM round trip).
    w_emb_t: [V, E] == embeddings.weight.T   (f32, gathered by row via DMA)
    w_out_t: [E, V] == output_layer.weight.T (bf16 preferred; cast otherwise)
    """
    B = idx.shape[0]
    V, E = w_emb_t.shape
    assert w_out_t.shape == (E, V), (w_out_t.shape, (E, V))

    w_emb_t = w_emb_t.astype(jnp.float32)
    w2 = w_out_t.astype(jnp.bfloat16)

    # Adaptive tiles: do not pad tiny batches up to 128; large-ish vocab tile
    # to amortize per-grid-step overhead (E=256 already matches the MXU K dim).
    if tb is None:
        tb = min(128, _round_up(B, 16))
    if tv is None:
        tv = min(1024, _round_up(V, 128))

    b_pad = _round_up(B, tb)
    v_pad = _round_up(V, tv)

    idx = idx.astype(jnp.int32)
    if b_pad != B:
        idx = jnp.pad(idx, (0, b_pad - B))          # padded rows gather row 0
    if v_pad != V:
        w2 = jnp.pad(w2, ((0, 0), (0, v_pad - V)))  # masked out of the LSE

    nb, nv = b_pad // tb, v_pad // tv

    # VMEM budget from the actual buffers (double-buffered pipeline inputs /
    # outputs + scratch), not a fixed constant.
    vmem_need = (2 * tb * v_pad * 4        # resident log-softmax output block
                 + 2 * E * tv * 2          # bf16 w_out tile
                 + tb * E * (4 + 2)        # f32 gather staging + bf16 hidden
                 + 8 * tb * 4              # m / l stats
                 + (2 << 20))              # slack
    vmem_limit = min(max(vmem_need, 16 * 1024 * 1024), 112 * 1024 * 1024)
    # TODO(synk): for very large V on v7x (64 MiB VMEM) the (tb, V_pad) resident
    # block will not fit; fall back to a two-pass scheme that recomputes logits
    # instead of keeping them resident.

    kernel = functools.partial(_skipgram_kernel, tb=tb, tv=tv, valid_v=V)
    cost = pl.CostEstimate(
        flops=2 * b_pad * E * v_pad,
        transcendentals=b_pad * v_pad,
        bytes_accessed=(b_pad * E * 4                 # gathered embedding rows
                        + nb * E * v_pad * 2          # w_out stream (per batch tile)
                        + b_pad * v_pad * 4           # single logits write
                        + b_pad * 4),                 # token ids
    )

    out = pl.pallas_call(
        kernel,
        out_shape=jax.ShapeDtypeStruct((b_pad, v_pad), jnp.float32),
        grid_spec=pltpu.PrefetchScalarGridSpec(
            num_scalar_prefetch=1,
            grid=(nb, nv),
            in_specs=[
                pl.BlockSpec(memory_space=pl.ANY),                 # w_emb_t in HBM
                pl.BlockSpec((E, tv), lambda b, v, idx: (0, v)),   # w_out tile
            ],
            out_specs=pl.BlockSpec((tb, v_pad), lambda b, v, idx: (b, 0)),
            scratch_shapes=[
                pltpu.VMEM((tb, E), jnp.float32),   # f32 gather staging
                pltpu.VMEM((tb, E), jnp.bfloat16),  # bf16 hidden (cast once)
                pltpu.VMEM((tb, 1), jnp.float32),   # running max
                pltpu.VMEM((tb, 1), jnp.float32),   # running sum-exp
                pltpu.SemaphoreType.DMA(()),        # shared gather semaphore
            ],
        ),
        compiler_params=pltpu.CompilerParams(
            dimension_semantics=("parallel", "arbitrary"),
            vmem_limit_bytes=vmem_limit,
        ),
        cost_estimate=cost,
    )(idx, w_emb_t, w2)

    return out[:B, :V]


def skipgram_forward(x, w_emb_t, w_out_t, *, tb=None, tv=None):
    """Module-parity entry point: x is [B, V] one-hot rows.

    For one-hot input the first Linear is an embedding-row gather, so extract
    the token ids and dispatch to the id-based path.  (Prefer calling
    skipgram_forward_ids directly to avoid reading the dense one-hot at all.)
    """
    B, V = x.shape
    Vw, E = w_emb_t.shape
    assert Vw == V and w_out_t.shape == (E, V)
    idx = jnp.argmax(x, axis=1).astype(jnp.int32)
    return skipgram_forward_ids(idx, w_emb_t, w_out_t, tb=tb, tv=tv)


if __name__ == "__main__":
    VOCAB_SIZE = 2048
    EMBED_DIM = 256
    BATCH = 8

    key = jax.random.PRNGKey(0)
    k_idx, k_w1, k_w2 = jax.random.split(key, 3)

    # Parameters stored directly in the compute layout:
    #   w_emb_t = embeddings.weight.T   [V, E]  f32
    #   w_out_t = output_layer.weight.T [E, V]  bf16 (halves dominant HBM stream)
    w_emb_t = jax.random.normal(k_w1, (VOCAB_SIZE, EMBED_DIM), jnp.float32) * 0.1
    w_out_t = (jax.random.normal(k_w2, (EMBED_DIM, VOCAB_SIZE), jnp.float32)
               * 0.1).astype(jnp.bfloat16)

    # One-hot input words, as in the PyTorch module.
    idx = jax.random.randint(k_idx, (BATCH,), 0, VOCAB_SIZE)
    x = jax.nn.one_hot(idx, VOCAB_SIZE, dtype=jnp.float32)

    out = skipgram_forward(x, w_emb_t, w_out_t)
    out = jax.block_until_ready(out)

    # Pure-JAX f32 reference of the module's math (bf16 matmul -> loosened tol).
    ref = jax.nn.log_softmax((x @ w_emb_t) @ w_out_t.astype(jnp.float32), axis=1)
    assert out.shape == (BATCH, VOCAB_SIZE)
    assert bool(jnp.allclose(out, ref, atol=2e-2, rtol=2e-2)), "mismatch vs reference"

    print("KERNEL_OK")
</pallas_src>

<mosaic_0001>
module attributes {stable_mosaic.version = 11 : i64} {
  func.func @_skipgram_kernel(%arg0: i32, %arg1: i32, %arg2: memref<16xi32, #tpu.memory_space<smem>>, %arg3: memref<2048x256xf32, #tpu.memory_space<any>>, %arg4: memref<256x1024xbf16, #tpu.memory_space<vmem>>, %arg5: memref<16x2048xf32, #tpu.memory_space<vmem>>, %arg6: memref<16x256xf32, #tpu.memory_space<vmem>>, %arg7: memref<16x256xbf16, #tpu.memory_space<vmem>>, %arg8: memref<16x1xf32, #tpu.memory_space<vmem>>, %arg9: memref<16x1xf32, #tpu.memory_space<vmem>>, %arg10: memref<!tpu.dma_semaphore, #tpu.memory_space<semaphore_mem>>) attributes {dimension_semantics = [#tpu.dimension_semantics<parallel>, #tpu.dimension_semantics<arbitrary>], iteration_bounds = array<i64: 1, 2>, scalar_prefetch = 1 : i64, scratch_operands = 5 : i64, tpu.core_type = #tpu.core_type<tc>, window_params = [{}, {transform_indices = @transform_1, window_bounds = array<i64: 256, 1024>}, {transform_indices = @transform_2, window_bounds = array<i64: 16, 2048>}]} {
    %c0_i32 = arith.constant 0 : i32
    %0 = arith.cmpi eq, %arg1, %c0_i32 : i32
    %1 = arith.extui %0 : i1 to i32
    %c0_i32_0 = arith.constant 0 : i32
    %2 = arith.cmpi ne, %1, %c0_i32_0 : i32
    scf.if %2 {
      %cst_16 = arith.constant 0xFF800000 : f32
      %29 = vector.broadcast %cst_16 : f32 to vector<16x1xf32>
      %c0_17 = arith.constant 0 : index
      %c0_18 = arith.constant 0 : index
      %30 = vector.load %arg8[%c0_17, %c0_18] : memref<16x1xf32, #tpu.memory_space<vmem>>, vector<16x1xf32>
      tpu.vector_store %arg8[%c0_17, %c0_18], %29 {strides = array<i32>} : memref<16x1xf32, #tpu.memory_space<vmem>>, vector<16x1xf32>,
      %cst_19 = arith.constant 0.000000e+00 : f32
      %31 = vector.broadcast %cst_19 : f32 to vector<16x1xf32>
      %c0_20 = arith.constant 0 : index
      %c0_21 = arith.constant 0 : index
      %32 = vector.load %arg9[%c0_20, %c0_21] : memref<16x1xf32, #tpu.memory_space<vmem>>, vector<16x1xf32>
      tpu.vector_store %arg9[%c0_20, %c0_21], %31 {strides = array<i32>} : memref<16x1xf32, #tpu.memory_space<vmem>>, vector<16x1xf32>,
      %c16_i32 = arith.constant 16 : i32
      %33 = arith.muli %arg0, %c16_i32 : i32
      %c0_i32_22 = arith.constant 0 : i32
      %c16_i32_23 = arith.constant 16 : i32
      %34 = arith.addi %c0_i32_22, %c16_i32_23 : i32
      %c1_i32_24 = arith.constant 1 : i32
      scf.for %arg11 = %c0_i32_22 to %34 step %c1_i32_24  : i32 {
        %c1_i32_34 = arith.constant 1 : i32
        %39 = arith.muli %arg11, %c1_i32_34 : i32
        %c0_i32_35 = arith.constant 0 : i32
        %40 = arith.addi %c0_i32_35, %39 : i32
        %41 = arith.addi %33, %40 : i32
        %42 = arith.index_cast %41 : i32 to index
        %43 = memref.load %arg2[%42] : memref<16xi32, #tpu.memory_space<smem>>
        %c0_i32_36 = arith.constant 0 : i32
        %44 = tpu.memref_slice %arg3[%43, %c0_i32_36] : memref<2048x256xf32, #tpu.memory_space<any>> -> memref<1x256xf32, #tpu.memory_space<any>>
        %c0_i32_37 = arith.constant 0 : i32
        %45 = tpu.memref_slice %arg6[%40, %c0_i32_37] : memref<16x256xf32, #tpu.memory_space<vmem>> -> memref<1x256xf32, #tpu.memory_space<vmem>>
        tpu.enqueue_dma source(%44 : memref<1x256xf32, #tpu.memory_space<any>>) target(%45 : memref<1x256xf32, #tpu.memory_space<vmem>>) target_semaphore(%arg10 : memref<!tpu.dma_semaphore, #tpu.memory_space<semaphore_mem>>)
      }
      %c16_i32_25 = arith.constant 16 : i32
      %c0_i32_26 = arith.constant 0 : i32
      %c16_i32_27 = arith.constant 16 : i32
      %35 = arith.addi %c0_i32_26, %c16_i32_27 : i32
      %c1_i32_28 = arith.constant 1 : i32
      scf.for %arg11 = %c0_i32_26 to %35 step %c1_i32_28  : i32 {
        %c1_i32_34 = arith.constant 1 : i32
        %39 = arith.muli %arg11, %c1_i32_34 : i32
        %c0_i32_35 = arith.constant 0 : i32
        %40 = arith.addi %c0_i32_35, %39 : i32
        %41 = arith.addi %33, %40 : i32
        %42 = arith.index_cast %41 : i32 to index
        %43 = memref.load %arg2[%42] : memref<16xi32, #tpu.memory_space<smem>>
        %c0_i32_36 = arith.constant 0 : i32
        %44 = tpu.memref_slice %arg3[%43, %c0_i32_36] : memref<2048x256xf32, #tpu.memory_space<any>> -> memref<1x256xf32, #tpu.memory_space<any>>
        %c0_i32_37 = arith.constant 0 : i32
        %45 = tpu.memref_slice %arg6[%40, %c0_i32_37] : memref<16x256xf32, #tpu.memory_space<vmem>> -> memref<1x256xf32, #tpu.memory_space<vmem>>
        tpu.wait_dma2 semaphore(%arg10 : memref<!tpu.dma_semaphore, #tpu.memory_space<semaphore_mem>>) src(%44 : memref<1x256xf32, #tpu.memory_space<any>>) dst(%45 : memref<1x256xf32, #tpu.memory_space<vmem>>)
      }
      %c16_i32_29 = arith.constant 16 : i32
      %c0_30 = arith.constant 0 : index
      %c0_31 = arith.constant 0 : index
      %36 = vector.load %arg6[%c0_30, %c0_31] : memref<16x256xf32, #tpu.memory_space<vmem>>, vector<16x256xf32>
      %37 = arith.truncf %36 : vector<16x256xf32> to vector<16x256xbf16>
      %c0_32 = arith.constant 0 : index
      %c0_33 = arith.constant 0 : index
      %38 = vector.load %arg7[%c0_32, %c0_33] : memref<16x256xbf16, #tpu.memory_space<vmem>>, vector<16x256xbf16>
      tpu.vector_store %arg7[%c0_32, %c0_33], %37 {strides = array<i32>} : memref<16x256xbf16, #tpu.memory_space<vmem>>, vector<16x256xbf16>,
    } else {
    }
    %c0 = arith.constant 0 : index
    %c0_1 = arith.constant 0 : index
    %3 = vector.load %arg7[%c0, %c0_1] : memref<16x256xbf16, #tpu.memory_space<vmem>>, vector<16x256xbf16>
    %c0_2 = arith.constant 0 : index
    %c0_3 = arith.constant 0 : index
    %4 = vector.load %arg4[%c0_2, %c0_3] : memref<256x1024xbf16, #tpu.memory_space<vmem>>, vector<256x1024xbf16>
    %cst = arith.constant dense<0.000000e+00> : vector<16x1024xf32>
    %5 = tpu.matmul %3, %4, %cst {dimension_numbers = #tpu.dot_dimension_numbers<[1], [0], [0], [1], [0, 0, 1, 1], [], []>} : vector<16x256xbf16>, vector<256x1024xbf16>, vector<16x1024xf32> -> vector<16x1024xf32>
    %c1024_i32 = arith.constant 1024 : i32
    %6 = arith.muli %arg1, %c1024_i32 : i32
    %7 = tpu.assume_multiple %6, 1024 : i32
    %c0_4 = arith.constant 0 : index
    %8 = arith.index_cast %7 : i32 to index
    %9 = vector.load %arg5[%c0_4, %8] : memref<16x2048xf32, #tpu.memory_space<vmem>>, vector<16x1024xf32>
    tpu.vector_store %arg5[%c0_4, %8], %5 {strides = array<i32>} : memref<16x2048xf32, #tpu.memory_space<vmem>>, vector<16x1024xf32>,
    %c0_5 = arith.constant 0 : index
    %c0_6 = arith.constant 0 : index
    %10 = vector.load %arg8[%c0_5, %c0_6] : memref<16x1xf32, #tpu.memory_space<vmem>>, vector<16x1xf32>
    %cst_7 = arith.constant dense<0xFF800000> : vector<16xf32>
    %11 = vector.multi_reduction <maximumf>, %5, %cst_7 [1] : vector<16x1024xf32> to vector<16xf32>
    %12 = vector.shape_cast %11 : vector<16xf32> to vector<16x1xf32>
    %13 = arith.maximumf %10, %12 : vector<16x1xf32>
    %14 = arith.subf %10, %13 : vector<16x1xf32>
    %15 = math.exp %14 : vector<16x1xf32>
    %c0_8 = arith.constant 0 : index
    %c0_9 = arith.constant 0 : index
    %16 = vector.load %arg9[%c0_8, %c0_9] : memref<16x1xf32, #tpu.memory_space<vmem>>, vector<16x1xf32>
    %17 = arith.mulf %15, %16 : vector<16x1xf32>
    %18 = vector.broadcast %13 : vector<16x1xf32> to vector<16x1024xf32>
    %19 = arith.subf %5, %18 : vector<16x1024xf32>
    %20 = math.exp %19 : vector<16x1024xf32>
    %cst_10 = arith.constant dense<0.000000e+00> : vector<16xf32>
    %21 = vector.multi_reduction <add>, %20, %cst_10 [1] : vector<16x1024xf32> to vector<16xf32>
    %22 = vector.shape_cast %21 : vector<16xf32> to vector<16x1xf32>
    %23 = arith.addf %17, %22 : vector<16x1xf32>
    %c0_11 = arith.constant 0 : index
    %c0_12 = arith.constant 0 : index
    %24 = vector.load %arg9[%c0_11, %c0_12] : memref<16x1xf32, #tpu.memory_space<vmem>>, vector<16x1xf32>
    tpu.vector_store %arg9[%c0_11, %c0_12], %23 {strides = array<i32>} : memref<16x1xf32, #tpu.memory_space<vmem>>, vector<16x1xf32>,
    %c0_13 = arith.constant 0 : index
    %c0_14 = arith.constant 0 : index
    %25 = vector.load %arg8[%c0_13, %c0_14] : memref<16x1xf32, #tpu.memory_space<vmem>>, vector<16x1xf32>
    tpu.vector_store %arg8[%c0_13, %c0_14], %13 {strides = array<i32>} : memref<16x1xf32, #tpu.memory_space<vmem>>, vector<16x1xf32>,
    %c1_i32 = arith.constant 1 : i32
    %26 = arith.cmpi eq, %arg1, %c1_i32 : i32
    %27 = arith.extui %26 : i1 to i32
    %c0_i32_15 = arith.constant 0 : i32
    %28 = arith.cmpi ne, %27, %c0_i32_15 : i32
    scf.if %28 {
      %c0_16 = arith.constant 0 : index
      %c0_17 = arith.constant 0 : index
      %29 = vector.load %arg5[%c0_16, %c0_17] : memref<16x2048xf32, #tpu.memory_space<vmem>>, vector<16x2048xf32>
      %c0_18 = arith.constant 0 : index
      %c0_19 = arith.constant 0 : index
      %30 = vector.load %arg8[%c0_18, %c0_19] : memref<16x1xf32, #tpu.memory_space<vmem>>, vector<16x1xf32>
      %c0_20 = arith.constant 0 : index
      %c0_21 = arith.constant 0 : index
      %31 = vector.load %arg9[%c0_20, %c0_21] : memref<16x1xf32, #tpu.memory_space<vmem>>, vector<16x1xf32>
      %32 = math.log %31 : vector<16x1xf32>
      %33 = arith.addf %30, %32 : vector<16x1xf32>
      %34 = vector.broadcast %33 : vector<16x1xf32> to vector<16x2048xf32>
      %35 = arith.subf %29, %34 : vector<16x2048xf32>
      %c0_22 = arith.constant 0 : index
      %c0_23 = arith.constant 0 : index
      %36 = vector.load %arg5[%c0_22, %c0_23] : memref<16x2048xf32, #tpu.memory_space<vmem>>, vector<16x2048xf32>
      tpu.vector_store %arg5[%c0_22, %c0_23], %35 {strides = array<i32>} : memref<16x2048xf32, #tpu.memory_space<vmem>>, vector<16x2048xf32>,
    } else {
    }
    return
  }
  func.func @transform_1(%arg0: i32, %arg1: i32, %arg2: memref<16xi32, #tpu.memory_space<smem>>) -> (i32, i32) {
    %c0_i32 = arith.constant 0 : i32
    %c0_i32_0 = arith.constant 0 : i32
    return %c0_i32, %arg1 : i32, i32
  }
  func.func @transform_2(%arg0: i32, %arg1: i32, %arg2: memref<16xi32, #tpu.memory_space<smem>>) -> (i32, i32) {
    %c0_i32 = arith.constant 0 : i32
    %c0_i32_0 = arith.constant 0 : i32
    return %arg0, %c0_i32 : i32, i32
  }
}

</mosaic_0001>

<llo_original>
// kernel: tpu_custom_call.1
$region0: #{tpu_custom_call.1}
  #allocation0 [shape = 'u32[]', space=smem, size = 0x4, offset = 0x4, fixed_abs, tag = 'smem constant byte address 0x4 - core index']
  #allocation1 [shape = 'u32[72,128]{1,0:T(1,128)}', space=vmem, size = 0x9000, scoped, tag = 'internal scratch']
  #allocation2 [shape = 'f32[16,256]{1,0:T(8,128)}', space=vmem, size = 0x4000, scoped, tag = 'scratch operand']
  #allocation3 [shape = 'bf16[16,256]{1,0:T(8,128)(2,1)}', space=vmem, size = 0x2000, scoped, tag = 'scratch operand']
  #allocation4 [shape = 'f32[16,1]{1,0:T(8,128)}', space=vmem, size = 0x2000, scoped, tag = 'scratch operand']
  #allocation5 [shape = 'f32[16,1]{1,0:T(8,128)}', space=vmem, size = 0x2000, scoped, tag = 'scratch operand']
  #allocation6 [shape = 's32[1]{0}', space=sflag, size = 0x4, scoped, tag = 'scratch operand']
  #allocation7 [shape = 's32[1]{0}', space=sflag, size = 0x4, scoped, tag = 'scoped memory for tpu_custom_call.1']
  #allocation8 [shape = 'u8[512]{0}', space=smem, size = 0x200, scoped, tag = 'prefetched SMEM operand 0']
  #allocation13 [shape = 's32[]', space=sflag, size = 0x4, offset = 0, fixed_abs, tag = 'sflag constant byte address 0x0 - dummy sync flag']
  %s0 = inlined_call_operand.hbm [shape: s32[16], index: 0, kind: input, shape index: {}]
  %s1 = inlined_call_operand.hbm [shape: f32[2048,256], index: 1, kind: input, shape index: {}]
  %s2 = inlined_call_operand.hbm [shape: bf16[256,2048], index: 2, kind: input, shape index: {}]
  %s3 = inlined_call_operand.hbm [shape: f32[16,2048], index: 3, kind: output, shape index: {}]
  %s4 = sld [smem:[#allocation0]]
  $region63: #{tpu_custom_call.1} parent=0
    _
  %s6 = ssub.s32 1, %s4
  %s7 = scalar_select 0, %s6, %s4
  %s9 = sshll.u32 %s0, 4
  %s10 = int_to_ptr.hbm [resolvable:$true] %s9
  %12 = dma.hbm_to_smem %s10, 16, [#allocation8], [#allocation7]
  %14 = dma.done [#allocation7], 16
  %15 = sfence
  $region1: #{tpu_custom_call.1} parent=0
    #allocation9 [shape = 'u8[1048576]{0}', space=vmem, size = 0x100000, scoped, tag = 'input window, operand 2']
    #allocation10 [shape = 's32[2]{0}', space=sflag, size = 0x8, scoped, tag = 'scoped memory for tpu_custom_call.1']
    #allocation11 [shape = 's32[2]{0}', space=sflag, size = 0x8, scoped, tag = 'scoped memory for tpu_custom_call.1']
    #allocation12 [shape = 'u8[131072]{0}', space=vmem, size = 0x20000, scoped, tag = 'output window, operand 0, single buffered']
    %16 = vsyncpa [#allocation10], 0
    %s17 = scalar_lea.sflag [#allocation10], 1
    %18 = vsyncpa %s17, 0
    %19 = vsyncpa [#allocation11], 0
    loop: start=0, step=1, limit=4
    $region2: #{tpu_custom_call.1} parent=1 // loop_pre_header
      _
    $region3: #{tpu_custom_call.1} parent=1 // loop_header
      %s21 = sphi 0, %s25
      %p22 = scmp.ge.s32.totalorder %s21, 4
      %s28 = sphi 0, %s40
      %s29 = sphi 0, %s36
      %s30 = sphi 0, %s28
      %s31 = sphi 0, %s29
      %s32 = sphi 0, %s30
      %s33 = sphi 0, %s31
      %s43 = sphi 0, %s45
      %s46 = sphi 0, %s43
      %s47 = sphi 0, %s46
      %s63 = sphi 0, %s47
      %s69 = sphi 0, %s71
      %s72 = sphi 0, %s69
      %s73 = sphi 0, %s72
      %s89 = sphi 0, %s73
    $region4: #{tpu_custom_call.1} parent=1 // loop_header_branch
      %24 = sbr.rel (%p22) target = $region8
    $region5: #{tpu_custom_call.1} parent=1 // loop_body
      %s26 = ssub.s32 %s21, 1
      %s27 = ssub.s32 %s21, 2
      %s34 = sadd.s32 1, %s29
      %p35 = scmp.ge.s32.totalorder %s34, 2
      %s36 = scalar_select %p35, 0, %s34
      %s37 = sadd.s32 1, %s28
      %s38 = scalar_select %p35, %s37, %s28
      %p39 = scmp.ge.s32.totalorder %s38, 1
      %s40 = scalar_select %p39, 0, %s38
      %s41 = ssub.s32 %s29, %s36
      %p42 = scmp.eq.s32.totalorder %s41, 0
      %s44 = sadd.s32 %s43, 1
      %s45 = scalar_select %p42, %s43, %s44
      %p48 = pneg %p42
      %p49 = scmp.eq.s32.totalorder %s21, 1
      %p50 = por %p48, %p49
      %p51 = scmp.ne.s32.totalorder %s43, %s46
      %p52 = scmp.eq.s32.totalorder %s21, 0
      %p53 = por %p51, %p52
      %p54 = scmp.ne.s32.totalorder %s43, %s46
      %p55 = scmp.eq.s32.totalorder %s26, 1
      %p56 = por %p54, %p55
      %p57 = scmp.ne.s32.totalorder %s46, %s47
      %p58 = scmp.eq.s32.totalorder %s26, 0
      %p59 = por %p57, %p58
      %p60 = scmp.ne.s32.totalorder %s46, %s47
      %p61 = scmp.eq.s32.totalorder %s27, 1
      %p62 = por %p60, %p61
      %p64 = scmp.ne.s32.totalorder %s47, %s63
      %p65 = scmp.eq.s32.totalorder %s27, 0
      %p66 = por %p64, %p65
      %s67 = ssub.s32 %s28, %s40
      %p68 = scmp.eq.s32.totalorder %s67, 0
      %s70 = sadd.s32 %s69, 1
      %s71 = scalar_select %p68, %s69, %s70
      %p74 = pneg %p68
      %p75 = scmp.eq.s32.totalorder %s21, 1
      %p76 = por %p74, %p75
      %p77 = scmp.ne.s32.totalorder %s69, %s72
      %p78 = scmp.eq.s32.totalorder %s21, 0
      %p79 = por %p77, %p78
      %p80 = scmp.ne.s32.totalorder %s69, %s72
      %p81 = scmp.eq.s32.totalorder %s26, 1
      %p82 = por %p80, %p81
      %p83 = scmp.ne.s32.totalorder %s72, %s73
      %p84 = scmp.eq.s32.totalorder %s26, 0
      %p85 = por %p83, %p84
      %p86 = scmp.ne.s32.totalorder %s72, %s73
      %p87 = scmp.eq.s32.totalorder %s27, 1
      %p88 = por %p86, %p87
      %p90 = scmp.ne.s32.totalorder %s73, %s89
      %p91 = scmp.eq.s32.totalorder %s27, 0
      %p92 = por %p90, %p91
      %p93 = scmp.le.s32.totalorder 1, %s21
      %p94 = scmp.lt.s32.totalorder %s21, 3
      %p95 = pnand %p93, %p94
      %p96 = pneg %p95
      // Predicated region
      $region9: #{tpu_custom_call.1} parent=5 // pred_check
        _
      $region10: #{tpu_custom_call.1} parent=5 // pred_check_branch
        %98 = sbr.rel (%p95) target = $region12
      $region11: #{tpu_custom_call.1} parent=5 // pred_region
        %s99 = ssub.s32 %s21, 1
      $region12: #{tpu_custom_call.1} parent=5 // pred_fallthru
        _
      %p100 = scmp.lt.s32.totalorder %s21, 2
      // Predicated region
      $region13: #{tpu_custom_call.1} parent=5 // pred_check
        %p101 = pneg %p100
      $region14: #{tpu_custom_call.1} parent=5 // pred_check_branch
        %103 = sbr.rel (%p101) target = $region16
      $region15: #{tpu_custom_call.1} parent=5 // pred_region
        // Predicated region
        $region17: #{tpu_custom_call.1} parent=15 // pred_check
          %p104 = pneg %p53
        $region18: #{tpu_custom_call.1} parent=15 // pred_check_branch
          %106 = sbr.rel (%p104) target = $region20
        $region19: #{tpu_custom_call.1} parent=15 // pred_region
          %s107 = sand.u32 %s43, 1
          %s108 = scalar_lea.sflag [#allocation10], %s107
          %s109 = sand.u32 %s43, 1
          %s110 = smul.addr %s109, 1024
          %s111 = scalar_lea.vmem [#allocation9], %s110
          %s112 = smul.u32 8, %s29
          %114 = vsyncadd %s108, 0
          %s115 = smul.addr %s112, 4
          %s116 = scalar_lea.hbm %s2, %s115
          %s117 = sshll.u32 %s116, 4
          %s118 = int_to_ptr.hbm [resolvable:$true] %s117
          %s119 = sshll.u32 %s111, 4
          %s120 = int_to_ptr.vmem [resolvable:$true] %s119
          %125 = dma.hbm_to_vmem [thread:$0]  %s118, 16384, %s120, %s108, 1024, 512, 32
        $region20: #{tpu_custom_call.1} parent=15 // pred_fallthru
          _
      $region16: #{tpu_custom_call.1} parent=5 // pred_fallthru
        _
      %p126 = scmp.le.s32.totalorder 1, %s21
      %p127 = scmp.lt.s32.totalorder %s21, 3
      %p128 = pnand %p126, %p127
      %p129 = pneg %p128
      // Predicated region
      $region21: #{tpu_custom_call.1} parent=5 // pred_check
        _
      $region22: #{tpu_custom_call.1} parent=5 // pred_check_branch
        %131 = sbr.rel (%p128) target = $region24
      $region23: #{tpu_custom_call.1} parent=5 // pred_region
        %s132 = ssub.s32 %s21, 1
        %s133 = sand.u32 %s46, 1
        %s134 = scalar_lea.sflag [#allocation10], %s133
        %s135 = sand.u32 %s46, 1
        %s136 = smul.addr %s135, 1024
        %s137 = scalar_lea.vmem [#allocation9], %s136
        // Predicated region
        $region25: #{tpu_custom_call.1} parent=23 // pred_check
          %p138 = pneg %p59
        $region26: #{tpu_custom_call.1} parent=23 // pred_check_branch
          %140 = sbr.rel (%p138) target = $region28
        $region27: #{tpu_custom_call.1} parent=23 // pred_region
          %142 = dma.done %s134, 16384
        $region28: #{tpu_custom_call.1} parent=23 // pred_fallthru
          _
        %s143 = sand.u32 %s46, 1
        %s144 = scalar_lea.sflag [#allocation10], %s143
        %s145 = sand.u32 %s46, 1
        %s146 = smul.addr %s145, 1024
        %s147 = scalar_lea.vmem [#allocation9], %s146
        %p148 = pneg %p59
        %p149 = pneg %p56
        %p150 = pneg %p85
        %p151 = pneg %p82
        %s152 = smul.u32 8, %s31
        %s153 = smul.u32 2, %s30
        %p154 = scmp.eq.s32.totalorder %s31, 0
        // Predicated region
        $region29: #{tpu_custom_call.1} parent=23 // pred_check
          %p155 = pneg %p154
        $region30: #{tpu_custom_call.1} parent=23 // pred_check_branch
          %157 = sbr.rel (%p155) target = $region32
        $region31: #{tpu_custom_call.1} parent=23 // pred_region
          %vm158 = vcmask 7168
          %159 = vst.msk [vmem:[#allocation4] sm:$0xff] %vm158, -inf
          %160 = vst.msk [vmem:[#allocation4 + $0x8] sm:$0xff] %vm158, -inf
          %161 = vst.msk [vmem:[#allocation5] sm:$0xff] %vm158, 0.0
          %162 = vst.msk [vmem:[#allocation5 + $0x8] sm:$0xff] %vm158, 0.0
          %s163 = smul.u32 %s30, 16
          loop: start=0, step=1, limit=16
          $region33: #{tpu_custom_call.1} parent=31 // loop_pre_header
            _
          $region34: #{tpu_custom_call.1} parent=31 // loop_header
            %s165 = sphi 0, %s169
            %p166 = scmp.ge.s32.totalorder %s165, 16
          $region35: #{tpu_custom_call.1} parent=31 // loop_header_branch
            %168 = sbr.rel (%p166) target = $region39
          $region36: #{tpu_custom_call.1} parent=31 // loop_body
            %s170 = sadd.s32 %s163, %s165
            %s171 = sld [smem:[#allocation8 + %s170]]
            %s172 = sshrl.u32 %s171, 3
            %s173 = sand.u32 %s171, 7
            %s174 = smul.u32 %s172, 16
            %s175 = sadd.s32 %s173, %s174
            %s176 = scalar_lea.hbm %s1, %s175
            %s177 = sshrl.u32 %s165, 3
            %s178 = sand.u32 %s165, 7
            %s179 = smul.u32 %s177, 16
            %s180 = sadd.s32 %s178, %s179
            %s181 = scalar_lea.vmem [#allocation2], %s180
            %s182 = sshll.u32 %s176, 4
            %s183 = int_to_ptr.hbm [resolvable:$true] %s182
            %s184 = sshll.u32 %s181, 4
            %s185 = int_to_ptr.vmem [resolvable:$true] %s184
            %189 = dma.hbm_to_vmem [thread:$0]  %s183, 32, %s185, [#allocation6], 128, 128, 1
          $region37: #{tpu_custom_call.1} parent=31 // loop_footer
            %s169 = sadd.s32 1, %s165
          $region38: #{tpu_custom_call.1} parent=31 // loop_footer_branch
            %164 = sbr.rel target = $region34
          $region39: #{tpu_custom_call.1} parent=31 // loop_exit
            _
          loop: start=0, step=1, limit=16
          $region40: #{tpu_custom_call.1} parent=31 // loop_pre_header
            _
          $region41: #{tpu_custom_call.1} parent=31 // loop_header
            %s191 = sphi 0, %s195
            %p192 = scmp.ge.s32.totalorder %s191, 16
          $region42: #{tpu_custom_call.1} parent=31 // loop_header_branch
            %194 = sbr.rel (%p192) target = $region46
          $region43: #{tpu_custom_call.1} parent=31 // loop_body
            %s196 = sadd.s32 %s163, %s191
            %s197 = sld [smem:[#allocation8 + %s196]]
            %s198 = smul.u32 1, 2
            %s199 = sshll.u32 %s198, 4
            %200 = dma.done [#allocation6], %s199
          $region44: #{tpu_custom_call.1} parent=31 // loop_footer
            %s195 = sadd.s32 1, %s191
          $region45: #{tpu_custom_call.1} parent=31 // loop_footer_branch
            %190 = sbr.rel target = $region41
          $region46: #{tpu_custom_call.1} parent=31 // loop_exit
            _
          %v201 = vld [vmem:[#allocation2] sm:$0xff]
          %v202 = vld [vmem:[#allocation2 + $0x8] sm:$0xff]
          %v203 = vld [vmem:[#allocation2 + $0x10] sm:$0xff]
          %v204 = vld [vmem:[#allocation2 + $0x18] sm:$0xff]
          %v205 = vpack.c.bf16 %v202, %v201
          %v206 = vpack.c.bf16 %v204, %v203
          %207 = vst [vmem:[#allocation3] sm:$0xff] %v205
          %208 = vst [vmem:[#allocation3 + $0x8] sm:$0xff] %v206
        $region32: #{tpu_custom_call.1} parent=23 // pred_fallthru
          _
        %v209 = vld [vmem:[#allocation3] sm:$0xff]
        %v210 = vld [vmem:[#allocation3 + $0x8] sm:$0xff]
        %v211 = vld [vmem:[%s137] sm:$0xff]
        %v212 = vld [vmem:[%s137 + $0x8] sm:$0xff]
        %v213 = vld [vmem:[%s137 + $0x10] sm:$0xff]
        %v214 = vld [vmem:[%s137 + $0x18] sm:$0xff]
        %v215 = vld [vmem:[%s137 + $0x20] sm:$0xff]
        %v216 = vld [vmem:[%s137 + $0x28] sm:$0xff]
        %v217 = vld [vmem:[%s137 + $0x30] sm:$0xff]
        %v218 = vld [vmem:[%s137 + $0x38] sm:$0xff]
        %v219 = vld [vmem:[%s137 + $0x40] sm:$0xff]
        %v220 = vld [vmem:[%s137 + $0x48] sm:$0xff]
        %v221 = vld [vmem:[%s137 + $0x50] sm:$0xff]
        %v222 = vld [vmem:[%s137 + $0x58] sm:$0xff]
        %v223 = vld [vmem:[%s137 + $0x60] sm:$0xff]
        %v224 = vld [vmem:[%s137 + $0x68] sm:$0xff]
        %v225 = vld [vmem:[%s137 + $0x70] sm:$0xff]
        %v226 = vld [vmem:[%s137 + $0x78] sm:$0xff]
        %v227 = vld [vmem:[%s137 + $0x80] sm:$0xff]
        %v228 = vld [vmem:[%s137 + $0x88] sm:$0xff]
        %v229 = vld [vmem:[%s137 + $0x90] sm:$0xff]
        %v230 = vld [vmem:[%s137 + $0x98] sm:$0xff]
        %v231 = vld [vmem:[%s137 + $0xa0] sm:$0xff]
        %v232 = vld [vmem:[%s137 + $0xa8] sm:$0xff]
        %v233 = vld [vmem:[%s137 + $0xb0] sm:$0xff]
        %v234 = vld [vmem:[%s137 + $0xb8] sm:$0xff]
        %v235 = vld [vmem:[%s137 + $0xc0] sm:$0xff]
        %v236 = vld [vmem:[%s137 + $0xc8] sm:$0xff]
        %v237 = vld [vmem:[%s137 + $0xd0] sm:$0xff]
        %v238 = vld [vmem:[%s137 + $0xd8] sm:$0xff]
        %v239 = vld [vmem:[%s137 + $0xe0] sm:$0xff]
        %v240 = vld [vmem:[%s137 + $0xe8] sm:$0xff]
        %v241 = vld [vmem:[%s137 + $0xf0] sm:$0xff]
        %v242 = vld [vmem:[%s137 + $0xf8] sm:$0xff]
        %v243 = vld [vmem:[%s137 + $0x100] sm:$0xff]
        %v244 = vld [vmem:[%s137 + $0x108] sm:$0xff]
        %v245 = vld [vmem:[%s137 + $0x110] sm:$0xff]
        %v246 = vld [vmem:[%s137 + $0x118] sm:$0xff]
        %v247 = vld [vmem:[%s137 + $0x120] sm:$0xff]
        %v248 = vld [vmem:[%s137 + $0x128] sm:$0xff]
        %v249 = vld [vmem:[%s137 + $0x130] sm:$0xff]
        %v250 = vld [vmem:[%s137 + $0x138] sm:$0xff]
        %v251 = vld [vmem:[%s137 + $0x140] sm:$0xff]
        %v252 = vld [vmem:[%s137 + $0x148] sm:$0xff]
        %v253 = vld [vmem:[%s137 + $0x150] sm:$0xff]
        %v254 = vld [vmem:[%s137 + $0x158] sm:$0xff]
        %v255 = vld [vmem:[%s137 + $0x160] sm:$0xff]
        %v256 = vld [vmem:[%s137 + $0x168] sm:$0xff]
        %v257 = vld [vmem:[%s137 + $0x170] sm:$0xff]
        %v258 = vld [vmem:[%s137 + $0x178] sm:$0xff]
        %v259 = vld [vmem:[%s137 + $0x180] sm:$0xff]
        %v260 = vld [vmem:[%s137 + $0x188] sm:$0xff]
        %v261 = vld [vmem:[%s137 + $0x190] sm:$0xff]
        %v262 = vld [vmem:[%s137 + $0x198] sm:$0xff]
        %v263 = vld [vmem:[%s137 + $0x1a0] sm:$0xff]
        %v264 = vld [vmem:[%s137 + $0x1a8] sm:$0xff]
        %v265 = vld [vmem:[%s137 + $0x1b0] sm:$0xff]
        %v266 = vld [vmem:[%s137 + $0x1b8] sm:$0xff]
        %v267 = vld [vmem:[%s137 + $0x1c0] sm:$0xff]
        %v268 = vld [vmem:[%s137 + $0x1c8] sm:$0xff]
        %v269 = vld [vmem:[%s137 + $0x1d0] sm:$0xff]
        %v270 = vld [vmem:[%s137 + $0x1d8] sm:$0xff]
        %v271 = vld [vmem:[%s137 + $0x1e0] sm:$0xff]
        %v272 = vld [vmem:[%s137 + $0x1e8] sm:$0xff]
        %v273 = vld [vmem:[%s137 + $0x1f0] sm:$0xff]
        %v274 = vld [vmem:[%s137 + $0x1f8] sm:$0xff]
        %v275 = vld [vmem:[%s137 + $0x200] sm:$0xff]
        %v276 = vld [vmem:[%s137 + $0x208] sm:$0xff]
        %v277 = vld [vmem:[%s137 + $0x210] sm:$0xff]
        %v278 = vld [vmem:[%s137 + $0x218] sm:$0xff]
        %v279 = vld [vmem:[%s137 + $0x220] sm:$0xff]
        %v280 = vld [vmem:[%s137 + $0x228] sm:$0xff]
        %v281 = vld [vmem:[%s137 + $0x230] sm:$0xff]
        %v282 = vld [vmem:[%s137 + $0x238] sm:$0xff]
        %v283 = vld [vmem:[%s137 + $0x240] sm:$0xff]
        %v284 = vld [vmem:[%s137 + $0x248] sm:$0xff]
        %v285 = vld [vmem:[%s137 + $0x250] sm:$0xff]
        %v286 = vld [vmem:[%s137 + $0x258] sm:$0xff]
        %v287 = vld [vmem:[%s137 + $0x260] sm:$0xff]
        %v288 = vld [vmem:[%s137 + $0x268] sm:$0xff]
        %v289 = vld [vmem:[%s137 + $0x270] sm:$0xff]
        %v290 = vld [vmem:[%s137 + $0x278] sm:$0xff]
        %v291 = vld [vmem:[%s137 + $0x280] sm:$0xff]
        %v292 = vld [vmem:[%s137 + $0x288] sm:$0xff]
        %v293 = vld [vmem:[%s137 + $0x290] sm:$0xff]
        %v294 = vld [vmem:[%s137 + $0x298] sm:$0xff]
        %v295 = vld [vmem:[%s137 + $0x2a0] sm:$0xff]
        %v296 = vld [vmem:[%s137 + $0x2a8] sm:$0xff]
        %v297 = vld [vmem:[%s137 + $0x2b0] sm:$0xff]
        %v298 = vld [vmem:[%s137 + $0x2b8] sm:$0xff]
        %v299 = vld [vmem:[%s137 + $0x2c0] sm:$0xff]
        %v300 = vld [vmem:[%s137 + $0x2c8] sm:$0xff]
        %v301 = vld [vmem:[%s137 + $0x2d0] sm:$0xff]
        %v302 = vld [vmem:[%s137 + $0x2d8] sm:$0xff]
        %v303 = vld [vmem:[%s137 + $0x2e0] sm:$0xff]
        %v304 = vld [vmem:[%s137 + $0x2e8] sm:$0xff]
        %v305 = vld [vmem:[%s137 + $0x2f0] sm:$0xff]
        %v306 = vld [vmem:[%s137 + $0x2f8] sm:$0xff]
        %v307 = vld [vmem:[%s137 + $0x300] sm:$0xff]
        %v308 = vld [vmem:[%s137 + $0x308] sm:$0xff]
        %v309 = vld [vmem:[%s137 + $0x310] sm:$0xff]
        %v310 = vld [vmem:[%s137 + $0x318] sm:$0xff]
        %v311 = vld [vmem:[%s137 + $0x320] sm:$0xff]
        %v312 = vld [vmem:[%s137 + $0x328] sm:$0xff]
        %v313 = vld [vmem:[%s137 + $0x330] sm:$0xff]
        %v314 = vld [vmem:[%s137 + $0x338] sm:$0xff]
        %v315 = vld [vmem:[%s137 + $0x340] sm:$0xff]
        %v316 = vld [vmem:[%s137 + $0x348] sm:$0xff]
        %v317 = vld [vmem:[%s137 + $0x350] sm:$0xff]
        %v318 = vld [vmem:[%s137 + $0x358] sm:$0xff]
        %v319 = vld [vmem:[%s137 + $0x360] sm:$0xff]
        %v320 = vld [vmem:[%s137 + $0x368] sm:$0xff]
        %v321 = vld [vmem:[%s137 + $0x370] sm:$0xff]
        %v322 = vld [vmem:[%s137 + $0x378] sm:$0xff]
        %v323 = vld [vmem:[%s137 + $0x380] sm:$0xff]
        %v324 = vld [vmem:[%s137 + $0x388] sm:$0xff]
        %v325 = vld [vmem:[%s137 + $0x390] sm:$0xff]
        %v326 = vld [vmem:[%s137 + $0x398] sm:$0xff]
        %v327 = vld [vmem:[%s137 + $0x3a0] sm:$0xff]
        %v328 = vld [vmem:[%s137 + $0x3a8] sm:$0xff]
        %v329 = vld [vmem:[%s137 + $0x3b0] sm:$0xff]
        %v330 = vld [vmem:[%s137 + $0x3b8] sm:$0xff]
        %v331 = vld [vmem:[%s137 + $0x3c0] sm:$0xff]
        %v332 = vld [vmem:[%s137 + $0x3c8] sm:$0xff]
        %v333 = vld [vmem:[%s137 + $0x3d0] sm:$0xff]
        %v334 = vld [vmem:[%s137 + $0x3d8] sm:$0xff]
        %v335 = vld [vmem:[%s137 + $0x3e0] sm:$0xff]
        %v336 = vld [vmem:[%s137 + $0x3e8] sm:$0xff]
        %v337 = vld [vmem:[%s137 + $0x3f0] sm:$0xff]
        %v338 = vld [vmem:[%s137 + $0x3f8] sm:$0xff]
        %v341 = vunpack.c.l.b16 %v209
        %v342 = vunpack.c.h.b16 %v209
        %v343 = vunpack.c.l.b16 %v210
        %v344 = vunpack.c.h.b16 %v210
        %v345 = vpack.c.b16 %v343, %v341
        %v346 = vpack.c.b16 %v344, %v342
        %v477 = vunpack.c.l.b16 %v211
        %v478 = vunpack.c.h.b16 %v211
        %v479 = vunpack.c.l.b16 %v212
        %v480 = vunpack.c.h.b16 %v212
        %v481 = vunpack.c.l.b16 %v213
        %v482 = vunpack.c.h.b16 %v213
        %v483 = vunpack.c.l.b16 %v214
        %v484 = vunpack.c.h.b16 %v214
        %v485 = vunpack.c.l.b16 %v215
        %v486 = vunpack.c.h.b16 %v215
        %v487 = vunpack.c.l.b16 %v216
        %v488 = vunpack.c.h.b16 %v216
        %v489 = vunpack.c.l.b16 %v217
        %v490 = vunpack.c.h.b16 %v217
        %v491 = vunpack.c.l.b16 %v218
        %v492 = vunpack.c.h.b16 %v218
        %v493 = vunpack.c.l.b16 %v219
        %v494 = vunpack.c.h.b16 %v219
        %v495 = vunpack.c.l.b16 %v220
        %v496 = vunpack.c.h.b16 %v220
        %v497 = vunpack.c.l.b16 %v221
        %v498 = vunpack.c.h.b16 %v221
        %v499 = vunpack.c.l.b16 %v222
        %v500 = vunpack.c.h.b16 %v222
        %v501 = vunpack.c.l.b16 %v223
        %v502 = vunpack.c.h.b16 %v223
        %v503 = vunpack.c.l.b16 %v224
        %v504 = vunpack.c.h.b16 %v224
        %v505 = vunpack.c.l.b16 %v225
        %v506 = vunpack.c.h.b16 %v225
        %v507 = vunpack.c.l.b16 %v226
        %v508 = vunpack.c.h.b16 %v226
        %v509 = vunpack.c.l.b16 %v227
        %v510 = vunpack.c.h.b16 %v227
        %v511 = vunpack.c.l.b16 %v228
        %v512 = vunpack.c.h.b16 %v228
        %v513 = vunpack.c.l.b16 %v229
        %v514 = vunpack.c.h.b16 %v229
        %v515 = vunpack.c.l.b16 %v230
        %v516 = vunpack.c.h.b16 %v230
        %v517 = vunpack.c.l.b16 %v231
        %v518 = vunpack.c.h.b16 %v231
        %v519 = vunpack.c.l.b16 %v232
        %v520 = vunpack.c.h.b16 %v232
        %v521 = vunpack.c.l.b16 %v233
        %v522 = vunpack.c.h.b16 %v233
        %v523 = vunpack.c.l.b16 %v234
        %v524 = vunpack.c.h.b16 %v234
        %v525 = vunpack.c.l.b16 %v235
        %v526 = vunpack.c.h.b16 %v235
        %v527 = vunpack.c.l.b16 %v236
        %v528 = vunpack.c.h.b16 %v236
        %v529 = vunpack.c.l.b16 %v237
        %v530 = vunpack.c.h.b16 %v237
        %v531 = vunpack.c.l.b16 %v238
        %v532 = vunpack.c.h.b16 %v238
        %v533 = vunpack.c.l.b16 %v239
        %v534 = vunpack.c.h.b16 %v239
        %v535 = vunpack.c.l.b16 %v240
        %v536 = vunpack.c.h.b16 %v240
        %v537 = vunpack.c.l.b16 %v241
        %v538 = vunpack.c.h.b16 %v241
        %v539 = vunpack.c.l.b16 %v242
        %v540 = vunpack.c.h.b16 %v242
        %v541 = vunpack.c.l.b16 %v243
        %v542 = vunpack.c.h.b16 %v243
        %v543 = vunpack.c.l.b16 %v244
        %v544 = vunpack.c.h.b16 %v244
        %v545 = vunpack.c.l.b16 %v245
        %v546 = vunpack.c.h.b16 %v245
        %v547 = vunpack.c.l.b16 %v246
        %v548 = vunpack.c.h.b16 %v246
        %v549 = vunpack.c.l.b16 %v247
        %v550 = vunpack.c.h.b16 %v247
        %v551 = vunpack.c.l.b16 %v248
        %v552 = vunpack.c.h.b16 %v248
        %v553 = vunpack.c.l.b16 %v249
        %v554 = vunpack.c.h.b16 %v249
        %v555 = vunpack.c.l.b16 %v250
        %v556 = vunpack.c.h.b16 %v250
        %v557 = vunpack.c.l.b16 %v251
        %v558 = vunpack.c.h.b16 %v251
        %v559 = vunpack.c.l.b16 %v252
        %v560 = vunpack.c.h.b16 %v252
        %v561 = vunpack.c.l.b16 %v253
        %v562 = vunpack.c.h.b16 %v253
        %v563 = vunpack.c.l.b16 %v254
        %v564 = vunpack.c.h.b16 %v254
        %v565 = vunpack.c.l.b16 %v255
        %v566 = vunpack.c.h.b16 %v255
        %v567 = vunpack.c.l.b16 %v256
        %v568 = vunpack.c.h.b16 %v256
        %v569 = vunpack.c.l.b16 %v257
        %v570 = vunpack.c.h.b16 %v257
        %v571 = vunpack.c.l.b16 %v258
        %v572 = vunpack.c.h.b16 %v258
        %v573 = vunpack.c.l.b16 %v259
        %v574 = vunpack.c.h.b16 %v259
        %v575 = vunpack.c.l.b16 %v260
        %v576 = vunpack.c.h.b16 %v260
        %v577 = vunpack.c.l.b16 %v261
        %v578 = vunpack.c.h.b16 %v261
        %v579 = vunpack.c.l.b16 %v262
        %v580 = vunpack.c.h.b16 %v262
        %v581 = vunpack.c.l.b16 %v263
        %v582 = vunpack.c.h.b16 %v263
        %v583 = vunpack.c.l.b16 %v264
        %v584 = vunpack.c.h.b16 %v264
        %v585 = vunpack.c.l.b16 %v265
        %v586 = vunpack.c.h.b16 %v265
        %v587 = vunpack.c.l.b16 %v266
        %v588 = vunpack.c.h.b16 %v266
        %v589 = vunpack.c.l.b16 %v267
        %v590 = vunpack.c.h.b16 %v267
        %v591 = vunpack.c.l.b16 %v268
        %v592 = vunpack.c.h.b16 %v268
        %v593 = vunpack.c.l.b16 %v269
        %v594 = vunpack.c.h.b16 %v269
        %v595 = vunpack.c.l.b16 %v270
        %v596 = vunpack.c.h.b16 %v270
        %v597 = vunpack.c.l.b16 %v271
        %v598 = vunpack.c.h.b16 %v271
        %v599 = vunpack.c.l.b16 %v272
        %v600 = vunpack.c.h.b16 %v272
        %v601 = vunpack.c.l.b16 %v273
        %v602 = vunpack.c.h.b16 %v273
        %v603 = vunpack.c.l.b16 %v274
        %v604 = vunpack.c.h.b16 %v274
        %v605 = vunpack.c.l.b16 %v275
        %v606 = vunpack.c.h.b16 %v275
        %v607 = vunpack.c.l.b16 %v276
        %v608 = vunpack.c.h.b16 %v276
        %v609 = vunpack.c.l.b16 %v277
        %v610 = vunpack.c.h.b16 %v277
        %v611 = vunpack.c.l.b16 %v278
        %v612 = vunpack.c.h.b16 %v278
        %v613 = vunpack.c.l.b16 %v279
        %v614 = vunpack.c.h.b16 %v279
        %v615 = vunpack.c.l.b16 %v280
        %v616 = vunpack.c.h.b16 %v280
        %v617 = vunpack.c.l.b16 %v281
        %v618 = vunpack.c.h.b16 %v281
        %v619 = vunpack.c.l.b16 %v282
        %v620 = vunpack.c.h.b16 %v282
        %v621 = vunpack.c.l.b16 %v283
        %v622 = vunpack.c.h.b16 %v283
        %v623 = vunpack.c.l.b16 %v284
        %v624 = vunpack.c.h.b16 %v284
        %v625 = vunpack.c.l.b16 %v285
        %v626 = vunpack.c.h.b16 %v285
        %v627 = vunpack.c.l.b16 %v286
        %v628 = vunpack.c.h.b16 %v286
        %v629 = vunpack.c.l.b16 %v287
        %v630 = vunpack.c.h.b16 %v287
        %v631 = vunpack.c.l.b16 %v288
        %v632 = vunpack.c.h.b16 %v288
        %v633 = vunpack.c.l.b16 %v289
        %v634 = vunpack.c.h.b16 %v289
        %v635 = vunpack.c.l.b16 %v290
        %v636 = vunpack.c.h.b16 %v290
        %v637 = vunpack.c.l.b16 %v291
        %v638 = vunpack.c.h.b16 %v291
        %v639 = vunpack.c.l.b16 %v292
        %v640 = vunpack.c.h.b16 %v292
        %v641 = vunpack.c.l.b16 %v293
        %v642 = vunpack.c.h.b16 %v293
        %v643 = vunpack.c.l.b16 %v294
        %v644 = vunpack.c.h.b16 %v294
        %v645 = vunpack.c.l.b16 %v295
        %v646 = vunpack.c.h.b16 %v295
        %v647 = vunpack.c.l.b16 %v296
        %v648 = vunpack.c.h.b16 %v296
        %v649 = vunpack.c.l.b16 %v297
        %v650 = vunpack.c.h.b16 %v297
        %v651 = vunpack.c.l.b16 %v298
        %v652 = vunpack.c.h.b16 %v298
        %v653 = vunpack.c.l.b16 %v299
        %v654 = vunpack.c.h.b16 %v299
        %v655 = vunpack.c.l.b16 %v300
        %v656 = vunpack.c.h.b16 %v300
        %v657 = vunpack.c.l.b16 %v301
        %v658 = vunpack.c.h.b16 %v301
        %v659 = vunpack.c.l.b16 %v302
        %v660 = vunpack.c.h.b16 %v302
        %v661 = vunpack.c.l.b16 %v303
        %v662 = vunpack.c.h.b16 %v303
        %v663 = vunpack.c.l.b16 %v304
        %v664 = vunpack.c.h.b16 %v304
        %v665 = vunpack.c.l.b16 %v305
        %v666 = vunpack.c.h.b16 %v305
        %v667 = vunpack.c.l.b16 %v306
        %v668 = vunpack.c.h.b16 %v306
        %v669 = vunpack.c.l.b16 %v307
        %v670 = vunpack.c.h.b16 %v307
        %v671 = vunpack.c.l.b16 %v308
        %v672 = vunpack.c.h.b16 %v308
        %v673 = vunpack.c.l.b16 %v309
        %v674 = vunpack.c.h.b16 %v309
        %v675 = vunpack.c.l.b16 %v310
        %v676 = vunpack.c.h.b16 %v310
        %v677 = vunpack.c.l.b16 %v311
        %v678 = vunpack.c.h.b16 %v311
        %v679 = vunpack.c.l.b16 %v312
        %v680 = vunpack.c.h.b16 %v312
        %v681 = vunpack.c.l.b16 %v313
        %v682 = vunpack.c.h.b16 %v313
        %v683 = vunpack.c.l.b16 %v314
        %v684 = vunpack.c.h.b16 %v314
        %v685 = vunpack.c.l.b16 %v315
        %v686 = vunpack.c.h.b16 %v315
        %v687 = vunpack.c.l.b16 %v316
        %v688 = vunpack.c.h.b16 %v316
        %v689 = vunpack.c.l.b16 %v317
        %v690 = vunpack.c.h.b16 %v317
        %v691 = vunpack.c.l.b16 %v318
        %v692 = vunpack.c.h.b16 %v318
        %v693 = vunpack.c.l.b16 %v319
        %v694 = vunpack.c.h.b16 %v319
        %v695 = vunpack.c.l.b16 %v320
        %v696 = vunpack.c.h.b16 %v320
        %v697 = vunpack.c.l.b16 %v321
        %v698 = vunpack.c.h.b16 %v321
        %v699 = vunpack.c.l.b16 %v322
        %v700 = vunpack.c.h.b16 %v322
        %v701 = vunpack.c.l.b16 %v323
        %v702 = vunpack.c.h.b16 %v323
        %v703 = vunpack.c.l.b16 %v324
        %v704 = vunpack.c.h.b16 %v324
        %v705 = vunpack.c.l.b16 %v325
        %v706 = vunpack.c.h.b16 %v325
        %v707 = vunpack.c.l.b16 %v326
        %v708 = vunpack.c.h.b16 %v326
        %v709 = vunpack.c.l.b16 %v327
        %v710 = vunpack.c.h.b16 %v327
        %v711 = vunpack.c.l.b16 %v328
        %v712 = vunpack.c.h.b16 %v328
        %v713 = vunpack.c.l.b16 %v329
        %v714 = vunpack.c.h.b16 %v329
        %v715 = vunpack.c.l.b16 %v330
        %v716 = vunpack.c.h.b16 %v330
        %v717 = vunpack.c.l.b16 %v331
        %v718 = vunpack.c.h.b16 %v331
        %v719 = vunpack.c.l.b16 %v332
        %v720 = vunpack.c.h.b16 %v332
        %v721 = vunpack.c.l.b16 %v333
        %v722 = vunpack.c.h.b16 %v333
        %v723 = vunpack.c.l.b16 %v334
        %v724 = vunpack.c.h.b16 %v334
        %v725 = vunpack.c.l.b16 %v335
        %v726 = vunpack.c.h.b16 %v335
        %v727 = vunpack.c.l.b16 %v336
        %v728 = vunpack.c.h.b16 %v336
        %v729 = vunpack.c.l.b16 %v337
        %v730 = vunpack.c.h.b16 %v337
        %v731 = vunpack.c.l.b16 %v338
        %v732 = vunpack.c.h.b16 %v338
        %v733 = vpack.c.b16 %v485, %v477
        %v734 = vpack.c.b16 %v486, %v478
        %v735 = vpack.c.b16 %v487, %v479
        %v736 = vpack.c.b16 %v488, %v480
        %v737 = vpack.c.b16 %v489, %v481
        %v738 = vpack.c.b16 %v490, %v482
        %v739 = vpack.c.b16 %v491, %v483
        %v740 = vpack.c.b16 %v492, %v484
        %v741 = vpack.c.b16 %v501, %v493
        %v742 = vpack.c.b16 %v502, %v494
        %v743 = vpack.c.b16 %v503, %v495
        %v744 = vpack.c.b16 %v504, %v496
        %v745 = vpack.c.b16 %v505, %v497
        %v746 = vpack.c.b16 %v506, %v498
        %v747 = vpack.c.b16 %v507, %v499
        %v748 = vpack.c.b16 %v508, %v500
        %v749 = vpack.c.b16 %v517, %v509
        %v750 = vpack.c.b16 %v518, %v510
        %v751 = vpack.c.b16 %v519, %v511
        %v752 = vpack.c.b16 %v520, %v512
        %v753 = vpack.c.b16 %v521, %v513
        %v754 = vpack.c.b16 %v522, %v514
        %v755 = vpack.c.b16 %v523, %v515
        %v756 = vpack.c.b16 %v524, %v516
        %v757 = vpack.c.b16 %v533, %v525
        %v758 = vpack.c.b16 %v534, %v526
        %v759 = vpack.c.b16 %v535, %v527
        %v760 = vpack.c.b16 %v536, %v528
        %v761 = vpack.c.b16 %v537, %v529
        %v762 = vpack.c.b16 %v538, %v530
        %v763 = vpack.c.b16 %v539, %v531
        %v764 = vpack.c.b16 %v540, %v532
        %v765 = vpack.c.b16 %v549, %v541
        %v766 = vpack.c.b16 %v550, %v542
        %v767 = vpack.c.b16 %v551, %v543
        %v768 = vpack.c.b16 %v552, %v544
        %v769 = vpack.c.b16 %v553, %v545
        %v770 = vpack.c.b16 %v554, %v546
        %v771 = vpack.c.b16 %v555, %v547
        %v772 = vpack.c.b16 %v556, %v548
        %v773 = vpack.c.b16 %v565, %v557
        %v774 = vpack.c.b16 %v566, %v558
        %v775 = vpack.c.b16 %v567, %v559
        %v776 = vpack.c.b16 %v568, %v560
        %v777 = vpack.c.b16 %v569, %v561
        %v778 = vpack.c.b16 %v570, %v562
        %v779 = vpack.c.b16 %v571, %v563
        %v780 = vpack.c.b16 %v572, %v564
        %v781 = vpack.c.b16 %v581, %v573
        %v782 = vpack.c.b16 %v582, %v574
        %v783 = vpack.c.b16 %v583, %v575
        %v784 = vpack.c.b16 %v584, %v576
        %v785 = vpack.c.b16 %v585, %v577
        %v786 = vpack.c.b16 %v586, %v578
        %v787 = vpack.c.b16 %v587, %v579
        %v788 = vpack.c.b16 %v588, %v580
        %v789 = vpack.c.b16 %v597, %v589
        %v790 = vpack.c.b16 %v598, %v590
        %v791 = vpack.c.b16 %v599, %v591
        %v792 = vpack.c.b16 %v600, %v592
        %v793 = vpack.c.b16 %v601, %v593
        %v794 = vpack.c.b16 %v602, %v594
        %v795 = vpack.c.b16 %v603, %v595
        %v796 = vpack.c.b16 %v604, %v596
        %v797 = vpack.c.b16 %v613, %v605
        %v798 = vpack.c.b16 %v614, %v606
        %v799 = vpack.c.b16 %v615, %v607
        %v800 = vpack.c.b16 %v616, %v608
        %v801 = vpack.c.b16 %v617, %v609
        %v802 = vpack.c.b16 %v618, %v610
        %v803 = vpack.c.b16 %v619, %v611
        %v804 = vpack.c.b16 %v620, %v612
        %v805 = vpack.c.b16 %v629, %v621
        %v806 = vpack.c.b16 %v630, %v622
        %v807 = vpack.c.b16 %v631, %v623
        %v808 = vpack.c.b16 %v632, %v624
        %v809 = vpack.c.b16 %v633, %v625
        %v810 = vpack.c.b16 %v634, %v626
        %v811 = vpack.c.b16 %v635, %v627
        %v812 = vpack.c.b16 %v636, %v628
        %v813 = vpack.c.b16 %v645, %v637
        %v814 = vpack.c.b16 %v646, %v638
        %v815 = vpack.c.b16 %v647, %v639
        %v816 = vpack.c.b16 %v648, %v640
        %v817 = vpack.c.b16 %v649, %v641
        %v818 = vpack.c.b16 %v650, %v642
        %v819 = vpack.c.b16 %v651, %v643
        %v820 = vpack.c.b16 %v652, %v644
        %v821 = vpack.c.b16 %v661, %v653
        %v822 = vpack.c.b16 %v662, %v654
        %v823 = vpack.c.b16 %v663, %v655
        %v824 = vpack.c.b16 %v664, %v656
        %v825 = vpack.c.b16 %v665, %v657
        %v826 = vpack.c.b16 %v666, %v658
        %v827 = vpack.c.b16 %v667, %v659
        %v828 = vpack.c.b16 %v668, %v660
        %v829 = vpack.c.b16 %v677, %v669
        %v830 = vpack.c.b16 %v678, %v670
        %v831 = vpack.c.b16 %v679, %v671
        %v832 = vpack.c.b16 %v680, %v672
        %v833 = vpack.c.b16 %v681, %v673
        %v834 = vpack.c.b16 %v682, %v674
        %v835 = vpack.c.b16 %v683, %v675
        %v836 = vpack.c.b16 %v684, %v676
        %v837 = vpack.c.b16 %v693, %v685
        %v838 = vpack.c.b16 %v694, %v686
        %v839 = vpack.c.b16 %v695, %v687
        %v840 = vpack.c.b16 %v696, %v688
        %v841 = vpack.c.b16 %v697, %v689
        %v842 = vpack.c.b16 %v698, %v690
        %v843 = vpack.c.b16 %v699, %v691
        %v844 = vpack.c.b16 %v700, %v692
        %v845 = vpack.c.b16 %v709, %v701
        %v846 = vpack.c.b16 %v710, %v702
        %v847 = vpack.c.b16 %v711, %v703
        %v848 = vpack.c.b16 %v712, %v704
        %v849 = vpack.c.b16 %v713, %v705
        %v850 = vpack.c.b16 %v714, %v706
        %v851 = vpack.c.b16 %v715, %v707
        %v852 = vpack.c.b16 %v716, %v708
        %v853 = vpack.c.b16 %v725, %v717
        %v854 = vpack.c.b16 %v726, %v718
        %v855 = vpack.c.b16 %v727, %v719
        %v856 = vpack.c.b16 %v728, %v720
        %v857 = vpack.c.b16 %v729, %v721
        %v858 = vpack.c.b16 %v730, %v722
        %v859 = vpack.c.b16 %v731, %v723
        %v860 = vpack.c.b16 %v732, %v724
        %989 = vmatpush.bf16.msra.mxu0 %v789
        %990 = vmatpush.bf16.msra.mxu0 %v781
        %991 = vmatpush.bf16.msra.mxu0 %v773
        %992 = vmatpush.bf16.msra.mxu0 %v765
        %993 = vmatpush.bf16.msra.mxu0 %v757
        %994 = vmatpush.bf16.msra.mxu0 %v749
        %995 = vmatpush.bf16.msra.mxu0 %v741
        %996 = vmatpush.bf16.msra.mxu0 %v733
        %997 = vmatmul.bf16.gmra.mxu0 %v345
        %v998 = vpop.f32.mrf.mxu0
        %v999 = vadd.f32 0.0, %v998
        %v1000 = vpop.f32.mrf.mxu0
        %v1001 = vadd.f32 0.0, %v1000
        %1002 = vdwg.mxu0
        %1003 = vmatpush.bf16.msra.mxu0 %v853
        %1004 = vmatpush.bf16.msra.mxu0 %v845
        %1005 = vmatpush.bf16.msra.mxu0 %v837
        %1006 = vmatpush.bf16.msra.mxu0 %v829
        %1007 = vmatpush.bf16.msra.mxu0 %v821
        %1008 = vmatpush.bf16.msra.mxu0 %v813
        %1009 = vmatpush.bf16.msra.mxu0 %v805
        %1010 = vmatpush.bf16.msra.mxu0 %v797
        %1011 = vmatmul.bf16.gmra.mxu0 %v346
        %v1012 = vpop.f32.mrf.mxu0
        %v1013 = vadd.f32 %v999, %v1012
        %v1014 = vpop.f32.mrf.mxu0
        %v1015 = vadd.f32 %v1001, %v1014
        %1016 = vdwg.mxu0
        %1017 = vmatpush.bf16.msra.mxu0 %v790
        %1018 = vmatpush.bf16.msra.mxu0 %v782
        %1019 = vmatpush.bf16.msra.mxu0 %v774
        %1020 = vmatpush.bf16.msra.mxu0 %v766
        %1021 = vmatpush.bf16.msra.mxu0 %v758
        %1022 = vmatpush.bf16.msra.mxu0 %v750
        %1023 = vmatpush.bf16.msra.mxu0 %v742
        %1024 = vmatpush.bf16.msra.mxu0 %v734
        %1025 = vmatmul.bf16.gmra.mxu0 %v345
        %v1026 = vpop.f32.mrf.mxu0
        %v1027 = vadd.f32 0.0, %v1026
        %v1028 = vpop.f32.mrf.mxu0
        %v1029 = vadd.f32 0.0, %v1028
        %1030 = vdwg.mxu0
        %1031 = vmatpush.bf16.msra.mxu0 %v854
        %1032 = vmatpush.bf16.msra.mxu0 %v846
        %1033 = vmatpush.bf16.msra.mxu0 %v838
        %1034 = vmatpush.bf16.msra.mxu0 %v830
        %1035 = vmatpush.bf16.msra.mxu0 %v822
        %1036 = vmatpush.bf16.msra.mxu0 %v814
        %1037 = vmatpush.bf16.msra.mxu0 %v806
        %1038 = vmatpush.bf16.msra.mxu0 %v798
        %1039 = vmatmul.bf16.gmra.mxu0 %v346
        %v1040 = vpop.f32.mrf.mxu0
        %v1041 = vadd.f32 %v1027, %v1040
        %v1042 = vpop.f32.mrf.mxu0
        %v1043 = vadd.f32 %v1029, %v1042
        %1044 = vdwg.mxu0
        %1045 = vmatpush.bf16.msra.mxu0 %v791
        %1046 = vmatpush.bf16.msra.mxu0 %v783
        %1047 = vmatpush.bf16.msra.mxu0 %v775
        %1048 = vmatpush.bf16.msra.mxu0 %v767
        %1049 = vmatpush.bf16.msra.mxu0 %v759
        %1050 = vmatpush.bf16.msra.mxu0 %v751
        %1051 = vmatpush.bf16.msra.mxu0 %v743
        %1052 = vmatpush.bf16.msra.mxu0 %v735
        %1053 = vmatmul.bf16.gmra.mxu0 %v345
        %v1054 = vpop.f32.mrf.mxu0
        %v1055 = vadd.f32 0.0, %v1054
        %v1056 = vpop.f32.mrf.mxu0
        %v1057 = vadd.f32 0.0, %v1056
        %1058 = vdwg.mxu0
        %1059 = vmatpush.bf16.msra.mxu0 %v855
        %1060 = vmatpush.bf16.msra.mxu0 %v847
        %1061 = vmatpush.bf16.msra.mxu0 %v839
        %1062 = vmatpush.bf16.msra.mxu0 %v831
        %1063 = vmatpush.bf16.msra.mxu0 %v823
        %1064 = vmatpush.bf16.msra.mxu0 %v815
        %1065 = vmatpush.bf16.msra.mxu0 %v807
        %1066 = vmatpush.bf16.msra.mxu0 %v799
        %1067 = vmatmul.bf16.gmra.mxu0 %v346
        %v1068 = vpop.f32.mrf.mxu0
        %v1069 = vadd.f32 %v1055, %v1068
        %v1070 = vpop.f32.mrf.mxu0
        %v1071 = vadd.f32 %v1057, %v1070
        %1072 = vdwg.mxu0
        %1073 = vmatpush.bf16.msra.mxu0 %v792
        %1074 = vmatpush.bf16.msra.mxu0 %v784
        %1075 = vmatpush.bf16.msra.mxu0 %v776
        %1076 = vmatpush.bf16.msra.mxu0 %v768
        %1077 = vmatpush.bf16.msra.mxu0 %v760
        %1078 = vmatpush.bf16.msra.mxu0 %v752
        %1079 = vmatpush.bf16.msra.mxu0 %v744
        %1080 = vmatpush.bf16.msra.mxu0 %v736
        %1081 = vmatmul.bf16.gmra.mxu0 %v345
        %v1082 = vpop.f32.mrf.mxu0
        %v1083 = vadd.f32 0.0, %v1082
        %v1084 = vpop.f32.mrf.mxu0
        %v1085 = vadd.f32 0.0, %v1084
        %1086 = vdwg.mxu0
        %1087 = vmatpush.bf16.msra.mxu0 %v856
        %1088 = vmatpush.bf16.msra.mxu0 %v848
        %1089 = vmatpush.bf16.msra.mxu0 %v840
        %1090 = vmatpush.bf16.msra.mxu0 %v832
        %1091 = vmatpush.bf16.msra.mxu0 %v824
        %1092 = vmatpush.bf16.msra.mxu0 %v816
        %1093 = vmatpush.bf16.msra.mxu0 %v808
        %1094 = vmatpush.bf16.msra.mxu0 %v800
        %1095 = vmatmul.bf16.gmra.mxu0 %v346
        %v1096 = vpop.f32.mrf.mxu0
        %v1097 = vadd.f32 %v1083, %v1096
        %v1098 = vpop.f32.mrf.mxu0
        %v1099 = vadd.f32 %v1085, %v1098
        %1100 = vdwg.mxu0
        %1101 = vmatpush.bf16.msra.mxu0 %v793
        %1102 = vmatpush.bf16.msra.mxu0 %v785
        %1103 = vmatpush.bf16.msra.mxu0 %v777
        %1104 = vmatpush.bf16.msra.mxu0 %v769
        %1105 = vmatpush.bf16.msra.mxu0 %v761
        %1106 = vmatpush.bf16.msra.mxu0 %v753
        %1107 = vmatpush.bf16.msra.mxu0 %v745
        %1108 = vmatpush.bf16.msra.mxu0 %v737
        %1109 = vmatmul.bf16.gmra.mxu0 %v345
        %v1110 = vpop.f32.mrf.mxu0
        %v1111 = vadd.f32 0.0, %v1110
        %v1112 = vpop.f32.mrf.mxu0
        %v1113 = vadd.f32 0.0, %v1112
        %1114 = vdwg.mxu0
        %1115 = vmatpush.bf16.msra.mxu0 %v857
        %1116 = vmatpush.bf16.msra.mxu0 %v849
        %1117 = vmatpush.bf16.msra.mxu0 %v841
        %1118 = vmatpush.bf16.msra.mxu0 %v833
        %1119 = vmatpush.bf16.msra.mxu0 %v825
        %1120 = vmatpush.bf16.msra.mxu0 %v817
        %1121 = vmatpush.bf16.msra.mxu0 %v809
        %1122 = vmatpush.bf16.msra.mxu0 %v801
        %1123 = vmatmul.bf16.gmra.mxu0 %v346
        %v1124 = vpop.f32.mrf.mxu0
        %v1125 = vadd.f32 %v1111, %v1124
        %v1126 = vpop.f32.mrf.mxu0
        %v1127 = vadd.f32 %v1113, %v1126
        %1128 = vdwg.mxu0
        %1129 = vmatpush.bf16.msra.mxu0 %v794
        %1130 = vmatpush.bf16.msra.mxu0 %v786
        %1131 = vmatpush.bf16.msra.mxu0 %v778
        %1132 = vmatpush.bf16.msra.mxu0 %v770
        %1133 = vmatpush.bf16.msra.mxu0 %v762
        %1134 = vmatpush.bf16.msra.mxu0 %v754
        %1135 = vmatpush.bf16.msra.mxu0 %v746
        %1136 = vmatpush.bf16.msra.mxu0 %v738
        %1137 = vmatmul.bf16.gmra.mxu0 %v345
        %v1138 = vpop.f32.mrf.mxu0
        %v1139 = vadd.f32 0.0, %v1138
        %v1140 = vpop.f32.mrf.mxu0
        %v1141 = vadd.f32 0.0, %v1140
        %1142 = vdwg.mxu0
        %1143 = vmatpush.bf16.msra.mxu0 %v858
        %1144 = vmatpush.bf16.msra.mxu0 %v850
        %1145 = vmatpush.bf16.msra.mxu0 %v842
        %1146 = vmatpush.bf16.msra.mxu0 %v834
        %1147 = vmatpush.bf16.msra.mxu0 %v826
        %1148 = vmatpush.bf16.msra.mxu0 %v818
        %1149 = vmatpush.bf16.msra.mxu0 %v810
        %1150 = vmatpush.bf16.msra.mxu0 %v802
        %1151 = vmatmul.bf16.gmra.mxu0 %v346
        %v1152 = vpop.f32.mrf.mxu0
        %v1153 = vadd.f32 %v1139, %v1152
        %v1154 = vpop.f32.mrf.mxu0
        %v1155 = vadd.f32 %v1141, %v1154
        %1156 = vdwg.mxu0
        %1157 = vmatpush.bf16.msra.mxu0 %v795
        %1158 = vmatpush.bf16.msra.mxu0 %v787
        %1159 = vmatpush.bf16.msra.mxu0 %v779
        %1160 = vmatpush.bf16.msra.mxu0 %v771
        %1161 = vmatpush.bf16.msra.mxu0 %v763
        %1162 = vmatpush.bf16.msra.mxu0 %v755
        %1163 = vmatpush.bf16.msra.mxu0 %v747
        %1164 = vmatpush.bf16.msra.mxu0 %v739
        %1165 = vmatmul.bf16.gmra.mxu0 %v345
        %v1166 = vpop.f32.mrf.mxu0
        %v1167 = vadd.f32 0.0, %v1166
        %v1168 = vpop.f32.mrf.mxu0
        %v1169 = vadd.f32 0.0, %v1168
        %1170 = vdwg.mxu0
        %1171 = vmatpush.bf16.msra.mxu0 %v859
        %1172 = vmatpush.bf16.msra.mxu0 %v851
        %1173 = vmatpush.bf16.msra.mxu0 %v843
        %1174 = vmatpush.bf16.msra.mxu0 %v835
        %1175 = vmatpush.bf16.msra.mxu0 %v827
        %1176 = vmatpush.bf16.msra.mxu0 %v819
        %1177 = vmatpush.bf16.msra.mxu0 %v811
        %1178 = vmatpush.bf16.msra.mxu0 %v803
        %1179 = vmatmul.bf16.gmra.mxu0 %v346
        %v1180 = vpop.f32.mrf.mxu0
        %v1181 = vadd.f32 %v1167, %v1180
        %v1182 = vpop.f32.mrf.mxu0
        %v1183 = vadd.f32 %v1169, %v1182
        %1184 = vdwg.mxu0
        %1185 = vmatpush.bf16.msra.mxu0 %v796
        %1186 = vmatpush.bf16.msra.mxu0 %v788
        %1187 = vmatpush.bf16.msra.mxu0 %v780
        %1188 = vmatpush.bf16.msra.mxu0 %v772
        %1189 = vmatpush.bf16.msra.mxu0 %v764
        %1190 = vmatpush.bf16.msra.mxu0 %v756
        %1191 = vmatpush.bf16.msra.mxu0 %v748
        %1192 = vmatpush.bf16.msra.mxu0 %v740
        %1193 = vmatmul.bf16.gmra.mxu0 %v345
        %v1194 = vpop.f32.mrf.mxu0
        %v1195 = vadd.f32 0.0, %v1194
        %v1196 = vpop.f32.mrf.mxu0
        %v1197 = vadd.f32 0.0, %v1196
        %1198 = vdwg.mxu0
        %1199 = vmatpush.bf16.msra.mxu0 %v860
        %1200 = vmatpush.bf16.msra.mxu0 %v852
        %1201 = vmatpush.bf16.msra.mxu0 %v844
        %1202 = vmatpush.bf16.msra.mxu0 %v836
        %1203 = vmatpush.bf16.msra.mxu0 %v828
        %1204 = vmatpush.bf16.msra.mxu0 %v820
        %1205 = vmatpush.bf16.msra.mxu0 %v812
        %1206 = vmatpush.bf16.msra.mxu0 %v804
        %1207 = vmatmul.bf16.gmra.mxu0 %v346
        %v1208 = vpop.f32.mrf.mxu0
        %v1209 = vadd.f32 %v1195, %v1208
        %v1210 = vpop.f32.mrf.mxu0
        %v1211 = vadd.f32 %v1197, %v1210
        %1212 = vdwg.mxu0
        %s1213 = smul.u32 %s31, 1024
        %s1214 = sshra.s32 %s1213, 7
        %s1215 = sand.u32 %s1213, 127
        %s1216 = smul.addr %s1214, 8
        %s1217 = scalar_lea.vmem [#allocation12], %s1216
        %1218 = vst [vmem:[%s1217] sm:$0xff] %v1013
        %1219 = vst [vmem:[%s1217 + $0x8] sm:$0xff] %v1041
        %1220 = vst [vmem:[%s1217 + $0x10] sm:$0xff] %v1069
        %1221 = vst [vmem:[%s1217 + $0x18] sm:$0xff] %v1097
        %1222 = vst [vmem:[%s1217 + $0x20] sm:$0xff] %v1125
        %1223 = vst [vmem:[%s1217 + $0x28] sm:$0xff] %v1153
        %1224 = vst [vmem:[%s1217 + $0x30] sm:$0xff] %v1181
        %1225 = vst [vmem:[%s1217 + $0x38] sm:$0xff] %v1209
        %1226 = vst [vmem:[%s1217 + $0x80] sm:$0xff] %v1015
        %1227 = vst [vmem:[%s1217 + $0x88] sm:$0xff] %v1043
        %1228 = vst [vmem:[%s1217 + $0x90] sm:$0xff] %v1071
        %1229 = vst [vmem:[%s1217 + $0x98] sm:$0xff] %v1099
        %1230 = vst [vmem:[%s1217 + $0xa0] sm:$0xff] %v1127
        %1231 = vst [vmem:[%s1217 + $0xa8] sm:$0xff] %v1155
        %1232 = vst [vmem:[%s1217 + $0xb0] sm:$0xff] %v1183
        %1233 = vst [vmem:[%s1217 + $0xb8] sm:$0xff] %v1211
        %v1234 = vld [vmem:[#allocation4] sm:$0xff]
        %v1235 = vld [vmem:[#allocation4 + $0x8] sm:$0xff]
        %v1236 = vmax.f32 %v1013, %v1069
        %v1237 = vmax.f32 %v1041, %v1097
        %v1238 = vmax.f32 %v1236, %v1125
        %v1239 = vmax.f32 %v1237, %v1153
        %v1240 = vmax.f32 %v1238, %v1181
        %v1241 = vmax.f32 %v1239, %v1209
        %v1242 = vmax.f32 %v1240, %v1241
        %1243 = vmax.xlane.f32.xlu0 %v1242
        %v1244 = vpop.xlane.xlu0 %1243
        %v1245 = vmax.f32 %v1015, %v1071
        %v1246 = vmax.f32 %v1043, %v1099
        %v1247 = vmax.f32 %v1245, %v1127
        %v1248 = vmax.f32 %v1246, %v1155
        %v1249 = vmax.f32 %v1247, %v1183
        %v1250 = vmax.f32 %v1248, %v1211
        %v1251 = vmax.f32 %v1249, %v1250
        %1252 = vmax.xlane.f32.xlu0 %v1251
        %v1253 = vpop.xlane.xlu0 %1252
        %v1254 = vmax.f32 %v1234, %v1244
        %v1255 = vmax.f32 %v1235, %v1253
        %v1256 = vsub.f32 %v1234, %v1254
        %v1257 = vsub.f32 %v1235, %v1255
        %v1258 = vmul.f32 %v1256, 1.442695
        %v1259 = vpow.pop %v1258
        %v1260 = vmul.f32 %v1257, 1.442695
        %v1261 = vpow.pop %v1260
        %v1262 = vld [vmem:[#allocation5] sm:$0xff]
        %v1263 = vld [vmem:[#allocation5 + $0x8] sm:$0xff]
        %v1264 = vmul.f32 %v1259, %v1262
        %v1265 = vmul.f32 %v1261, %v1263
        %1267 = vset.pattern.permute.xlu0 0
        %1268 = vperm.xlu0 %1267, %v1254
        %v1269 = vpop.permute.xlu0 %1268
        %1272 = vset.pattern.permute.xlu0 0
        %1273 = vperm.xlu0 %1272, %v1255
        %v1274 = vpop.permute.xlu0 %1273
        %v1276 = vsub.f32 %v1013, %v1269
        %v1277 = vsub.f32 %v1041, %v1269
        %v1278 = vsub.f32 %v1069, %v1269
        %v1279 = vsub.f32 %v1097, %v1269
        %v1280 = vsub.f32 %v1125, %v1269
        %v1281 = vsub.f32 %v1153, %v1269
        %v1282 = vsub.f32 %v1181, %v1269
        %v1283 = vsub.f32 %v1209, %v1269
        %v1284 = vsub.f32 %v1015, %v1274
        %v1285 = vsub.f32 %v1043, %v1274
        %v1286 = vsub.f32 %v1071, %v1274
        %v1287 = vsub.f32 %v1099, %v1274
        %v1288 = vsub.f32 %v1127, %v1274
        %v1289 = vsub.f32 %v1155, %v1274
        %v1290 = vsub.f32 %v1183, %v1274
        %v1291 = vsub.f32 %v1211, %v1274
        %v1292 = vmul.f32 %v1276, 1.442695
        %v1293 = vpow.pop %v1292
        %v1294 = vmul.f32 %v1277, 1.442695
        %v1295 = vpow.pop %v1294
        %v1296 = vmul.f32 %v1278, 1.442695
        %v1297 = vpow.pop %v1296
        %v1298 = vmul.f32 %v1279, 1.442695
        %v1299 = vpow.pop %v1298
        %v1300 = vmul.f32 %v1280, 1.442695
        %v1301 = vpow.pop %v1300
        %v1302 = vmul.f32 %v1281, 1.442695
        %v1303 = vpow.pop %v1302
        %v1304 = vmul.f32 %v1282, 1.442695
        %v1305 = vpow.pop %v1304
        %v1306 = vmul.f32 %v1283, 1.442695
        %v1307 = vpow.pop %v1306
        %v1308 = vmul.f32 %v1284, 1.442695
        %v1309 = vpow.pop %v1308
        %v1310 = vmul.f32 %v1285, 1.442695
        %v1311 = vpow.pop %v1310
        %v1312 = vmul.f32 %v1286, 1.442695
        %v1313 = vpow.pop %v1312
        %v1314 = vmul.f32 %v1287, 1.442695
        %v1315 = vpow.pop %v1314
        %v1316 = vmul.f32 %v1288, 1.442695
        %v1317 = vpow.pop %v1316
        %v1318 = vmul.f32 %v1289, 1.442695
        %v1319 = vpow.pop %v1318
        %v1320 = vmul.f32 %v1290, 1.442695
        %v1321 = vpow.pop %v1320
        %v1322 = vmul.f32 %v1291, 1.442695
        %v1323 = vpow.pop %v1322
        %v1324 = vadd.f32 %v1293, %v1295
        %v1325 = vadd.f32 %v1324, %v1297
        %v1326 = vadd.f32 %v1325, %v1299
        %v1327 = vadd.f32 %v1326, %v1301
        %v1328 = vadd.f32 %v1327, %v1303
        %v1329 = vadd.f32 %v1328, %v1305
        %v1330 = vadd.f32 %v1329, %v1307
        %1331 = vadd.xlane.f32.xlu0 %v1330
        %v1332 = vpop.xlane.xlu0 %1331
        %v1333 = vadd.f32 %v1309, %v1311
        %v1334 = vadd.f32 %v1333, %v1313
        %v1335 = vadd.f32 %v1334, %v1315
        %v1336 = vadd.f32 %v1335, %v1317
        %v1337 = vadd.f32 %v1336, %v1319
        %v1338 = vadd.f32 %v1337, %v1321
        %v1339 = vadd.f32 %v1338, %v1323
        %1340 = vadd.xlane.f32.xlu0 %v1339
        %v1341 = vpop.xlane.xlu0 %1340
        %v1342 = vadd.f32 %v1264, %v1332
        %v1343 = vadd.f32 %v1265, %v1341
        %vm1344 = vcmask 7168
        %1345 = vst.msk [vmem:[#allocation5] sm:$0xff] %vm1344, %v1342
        %1346 = vst.msk [vmem:[#allocation5 + $0x8] sm:$0xff] %vm1344, %v1343
        %1347 = vst.msk [vmem:[#allocation4] sm:$0xff] %vm1344, %v1254
        %1348 = vst.msk [vmem:[#allocation4 + $0x8] sm:$0xff] %vm1344, %v1255
        %p1349 = scmp.eq.s32.totalorder %s31, 1
        // Predicated region
        $region47: #{tpu_custom_call.1} parent=23 // pred_check
          %p1350 = pneg %p1349
        $region48: #{tpu_custom_call.1} parent=23 // pred_check_branch
          %1352 = sbr.rel (%p1350) target = $region50
        $region49: #{tpu_custom_call.1} parent=23 // pred_region
          %v1353 = vld [vmem:[#allocation12] sm:$0xff]
          %v1354 = vld [vmem:[#allocation12 + $0x8] sm:$0xff]
          %v1355 = vld [vmem:[#allocation12 + $0x10] sm:$0xff]
          %v1356 = vld [vmem:[#allocation12 + $0x18] sm:$0xff]
          %v1357 = vld [vmem:[#allocation12 + $0x20] sm:$0xff]
          %v1358 = vld [vmem:[#allocation12 + $0x28] sm:$0xff]
          %v1359 = vld [vmem:[#allocation12 + $0x30] sm:$0xff]
          %v1360 = vld [vmem:[#allocation12 + $0x38] sm:$0xff]
          %v1361 = vld [vmem:[#allocation12 + $0x40] sm:$0xff]
          %v1362 = vld [vmem:[#allocation12 + $0x48] sm:$0xff]
          %v1363 = vld [vmem:[#allocation12 + $0x50] sm:$0xff]
          %v1364 = vld [vmem:[#allocation12 + $0x58] sm:$0xff]
          %v1365 = vld [vmem:[#allocation12 + $0x60] sm:$0xff]
          %v1366 = vld [vmem:[#allocation12 + $0x68] sm:$0xff]
          %v1367 = vld [vmem:[#allocation12 + $0x70] sm:$0xff]
          %v1368 = vld [vmem:[#allocation12 + $0x78] sm:$0xff]
          %v1369 = vld [vmem:[#allocation12 + $0x80] sm:$0xff]
          %v1370 = vld [vmem:[#allocation12 + $0x88] sm:$0xff]
          %v1371 = vld [vmem:[#allocation12 + $0x90] sm:$0xff]
          %v1372 = vld [vmem:[#allocation12 + $0x98] sm:$0xff]
          %v1373 = vld [vmem:[#allocation12 + $0xa0] sm:$0xff]
          %v1374 = vld [vmem:[#allocation12 + $0xa8] sm:$0xff]
          %v1375 = vld [vmem:[#allocation12 + $0xb0] sm:$0xff]
          %v1376 = vld [vmem:[#allocation12 + $0xb8] sm:$0xff]
          %v1377 = vld [vmem:[#allocation12 + $0xc0] sm:$0xff]
          %v1378 = vld [vmem:[#allocation12 + $0xc8] sm:$0xff]
          %v1379 = vld [vmem:[#allocation12 + $0xd0] sm:$0xff]
          %v1380 = vld [vmem:[#allocation12 + $0xd8] sm:$0xff]
          %v1381 = vld [vmem:[#allocation12 + $0xe0] sm:$0xff]
          %v1382 = vld [vmem:[#allocation12 + $0xe8] sm:$0xff]
          %v1383 = vld [vmem:[#allocation12 + $0xf0] sm:$0xff]
          %v1384 = vld [vmem:[#allocation12 + $0xf8] sm:$0xff]
          %v1385 = vld [vmem:[#allocation4] sm:$0xff]
          %v1386 = vld [vmem:[#allocation4 + $0x8] sm:$0xff]
          %v1387 = vld [vmem:[#allocation5] sm:$0xff]
          %v1388 = vld [vmem:[#allocation5 + $0x8] sm:$0xff]
          %v1389 = vlog2.pop %v1387
          %v1390 = vmul.f32 %v1389, 0.6931472
          %v1391 = vlog2.pop %v1388
          %v1392 = vmul.f32 %v1391, 0.6931472
          %v1393 = vadd.f32 %v1385, %v1390
          %v1394 = vadd.f32 %v1386, %v1392
          %1396 = vset.pattern.permute.xlu0 0
          %1397 = vperm.xlu0 %1396, %v1393
          %v1398 = vpop.permute.xlu0 %1397
          %1401 = vset.pattern.permute.xlu0 0
          %1402 = vperm.xlu0 %1401, %v1394
          %v1403 = vpop.permute.xlu0 %1402
          %v1405 = vsub.f32 %v1353, %v1398
          %v1406 = vsub.f32 %v1354, %v1398
          %v1407 = vsub.f32 %v1355, %v1398
          %v1408 = vsub.f32 %v1356, %v1398
          %v1409 = vsub.f32 %v1357, %v1398
          %v1410 = vsub.f32 %v1358, %v1398
          %v1411 = vsub.f32 %v1359, %v1398
          %v1412 = vsub.f32 %v1360, %v1398
          %v1413 = vsub.f32 %v1361, %v1398
          %v1414 = vsub.f32 %v1362, %v1398
          %v1415 = vsub.f32 %v1363, %v1398
          %v1416 = vsub.f32 %v1364, %v1398
          %v1417 = vsub.f32 %v1365, %v1398
          %v1418 = vsub.f32 %v1366, %v1398
          %v1419 = vsub.f32 %v1367, %v1398
          %v1420 = vsub.f32 %v1368, %v1398
          %v1421 = vsub.f32 %v1369, %v1403
          %v1422 = vsub.f32 %v1370, %v1403
          %v1423 = vsub.f32 %v1371, %v1403
          %v1424 = vsub.f32 %v1372, %v1403
          %v1425 = vsub.f32 %v1373, %v1403
          %v1426 = vsub.f32 %v1374, %v1403
          %v1427 = vsub.f32 %v1375, %v1403
          %v1428 = vsub.f32 %v1376, %v1403
          %v1429 = vsub.f32 %v1377, %v1403
          %v1430 = vsub.f32 %v1378, %v1403
          %v1431 = vsub.f32 %v1379, %v1403
          %v1432 = vsub.f32 %v1380, %v1403
          %v1433 = vsub.f32 %v1381, %v1403
          %v1434 = vsub.f32 %v1382, %v1403
          %v1435 = vsub.f32 %v1383, %v1403
          %v1436 = vsub.f32 %v1384, %v1403
          %1437 = vst [vmem:[#allocation12] sm:$0xff] %v1405
          %1438 = vst [vmem:[#allocation12 + $0x8] sm:$0xff] %v1406
          %1439 = vst [vmem:[#allocation12 + $0x10] sm:$0xff] %v1407
          %1440 = vst [vmem:[#allocation12 + $0x18] sm:$0xff] %v1408
          %1441 = vst [vmem:[#allocation12 + $0x20] sm:$0xff] %v1409
          %1442 = vst [vmem:[#allocation12 + $0x28] sm:$0xff] %v1410
          %1443 = vst [vmem:[#allocation12 + $0x30] sm:$0xff] %v1411
          %1444 = vst [vmem:[#allocation12 + $0x38] sm:$0xff] %v1412
          %1445 = vst [vmem:[#allocation12 + $0x40] sm:$0xff] %v1413
          %1446 = vst [vmem:[#allocation12 + $0x48] sm:$0xff] %v1414
          %1447 = vst [vmem:[#allocation12 + $0x50] sm:$0xff] %v1415
          %1448 = vst [vmem:[#allocation12 + $0x58] sm:$0xff] %v1416
          %1449 = vst [vmem:[#allocation12 + $0x60] sm:$0xff] %v1417
          %1450 = vst [vmem:[#allocation12 + $0x68] sm:$0xff] %v1418
          %1451 = vst [vmem:[#allocation12 + $0x70] sm:$0xff] %v1419
          %1452 = vst [vmem:[#allocation12 + $0x78] sm:$0xff] %v1420
          %1453 = vst [vmem:[#allocation12 + $0x80] sm:$0xff] %v1421
          %1454 = vst [vmem:[#allocation12 + $0x88] sm:$0xff] %v1422
          %1455 = vst [vmem:[#allocation12 + $0x90] sm:$0xff] %v1423
          %1456 = vst [vmem:[#allocation12 + $0x98] sm:$0xff] %v1424
          %1457 = vst [vmem:[#allocation12 + $0xa0] sm:$0xff] %v1425
          %1458 = vst [vmem:[#allocation12 + $0xa8] sm:$0xff] %v1426
          %1459 = vst [vmem:[#allocation12 + $0xb0] sm:$0xff] %v1427
          %1460 = vst [vmem:[#allocation12 + $0xb8] sm:$0xff] %v1428
          %1461 = vst [vmem:[#allocation12 + $0xc0] sm:$0xff] %v1429
          %1462 = vst [vmem:[#allocation12 + $0xc8] sm:$0xff] %v1430
          %1463 = vst [vmem:[#allocation12 + $0xd0] sm:$0xff] %v1431
          %1464 = vst [vmem:[#allocation12 + $0xd8] sm:$0xff] %v1432
          %1465 = vst [vmem:[#allocation12 + $0xe0] sm:$0xff] %v1433
          %1466 = vst [vmem:[#allocation12 + $0xe8] sm:$0xff] %v1434
          %1467 = vst [vmem:[#allocation12 + $0xf0] sm:$0xff] %v1435
          %1468 = vst [vmem:[#allocation12 + $0xf8] sm:$0xff] %v1436
        $region50: #{tpu_custom_call.1} parent=23 // pred_fallthru
          _
        // Predicated region
        $region51: #{tpu_custom_call.1} parent=23 // pred_check
          %p1469 = pneg %p82
        $region52: #{tpu_custom_call.1} parent=23 // pred_check_branch
          %1471 = sbr.rel (%p1469) target = $region54
        $region53: #{tpu_custom_call.1} parent=23 // pred_region
          %s1472 = smul.u32 2, %s30
          %1474 = vsyncadd [#allocation11], 0
          %s1475 = smul.addr %s1472, 16
          %s1476 = smul.addr %s1475, 8
          %s1477 = scalar_lea.hbm %s3, %s1476
          %s1478 = sshll.u32 [#allocation12], 4
          %s1479 = int_to_ptr.vmem [resolvable:$true] %s1478
          %s1480 = sshll.u32 %s1477, 4
          %s1481 = int_to_ptr.hbm [resolvable:$true] %s1480
          %1486 = dma.vmem_to_hbm [thread:$0]  %s1479, 4096, %s1481, [#allocation11], 2048, 2048, 128
        $region54: #{tpu_custom_call.1} parent=23 // pred_fallthru
          _
        // Predicated region
        $region55: #{tpu_custom_call.1} parent=23 // pred_check
          %p1487 = pneg %p82
        $region56: #{tpu_custom_call.1} parent=23 // pred_check_branch
          %1489 = sbr.rel (%p1487) target = $region58
        $region57: #{tpu_custom_call.1} parent=23 // pred_region
          %1491 = dma.done [#allocation11], 4096
        $region58: #{tpu_custom_call.1} parent=23 // pred_fallthru
          _
      $region24: #{tpu_custom_call.1} parent=5 // pred_fallthru
        _
      %p1492 = scmp.le.s32.totalorder 2, %s21
      // Predicated region
      $region59: #{tpu_custom_call.1} parent=5 // pred_check
        %p1493 = pneg %p1492
      $region60: #{tpu_custom_call.1} parent=5 // pred_check_branch
        %1495 = sbr.rel (%p1493) target = $region62
      $region61: #{tpu_custom_call.1} parent=5 // pred_region
        %s1496 = ssub.s32 %s21, 2
      $region62: #{tpu_custom_call.1} parent=5 // pred_fallthru
        _
    $region6: #{tpu_custom_call.1} parent=1 // loop_footer
      %s25 = sadd.s32 1, %s21
    $region7: #{tpu_custom_call.1} parent=1 // loop_footer_branch
      %20 = sbr.rel target = $region3
    $region8: #{tpu_custom_call.1} parent=1 // loop_exit
      _
    %1497 = vsyncpa [#allocation10], 1
    %s1498 = scalar_lea.sflag [#allocation10], 1
    %1499 = vsyncpa %s1498, 1
    %1500 = vsyncpa [#allocation11], 1
    %s1501 = scalar_lea.sflag [#allocation11], 1
    %1502 = vsyncpa %s1501, 1
  %1503 = vsyncmov [#allocation6]
  %s1504 = vpop.sfrf %1503
  %p1505 = scmp.eq.s32.totalorder %s1504, 0
  %p1506 = pneg %p1505
  %1508 = shalt.err (%p1506)

</llo_original>
